<compile_context>
chip_gen: v5e
topology: v5e:2x2
jax: 0.10.0
libtpu: 0.0.40
codegen_flags: <defaults>
</compile_context>

<pallas_src>
import math

import jax
import jax.numpy as jnp
from jax import lax
from jax.experimental import pallas as pl
from jax.experimental.pallas import tpu as pltpu

_BIG = 1e30                     # "other batch / padding" distance sentinel
_VMEM_LIMIT = 32 * 1024 * 1024  # safe on v5e/v6e (128 MiB) and v7x (64 MiB physical)


def _round_up(x, m):
    return (x + m - 1) // m * m


# ---------------- Kernel A: fused Linear + folded BatchNorm(eval) + ReLU ----------------
def _mlp_kernel(x_ref, w_ref, shift_ref, o_ref):
    y = jnp.dot(x_ref[...], w_ref[...], preferred_element_type=jnp.float32)
    o_ref[...] = jnp.maximum(y + shift_ref[...], 0.0)


def mlp_forward(x, w_folded, shift_folded, *, tm_pref=512):
    n, cin = x.shape
    cp = w_folded.shape[1]                       # padded (128-multiple) output channels
    tm = min(tm_pref, _round_up(n, 8))
    n_pad = _round_up(n, tm)
    x_p = jnp.pad(x, ((0, n_pad - n), (0, 0)))
    return pl.pallas_call(
        _mlp_kernel,
        out_shape=jax.ShapeDtypeStruct((n_pad, cp), jnp.float32),
        grid_spec=pltpu.PrefetchScalarGridSpec(
            num_scalar_prefetch=0,
            grid=(n_pad // tm,),
            in_specs=[
                pl.BlockSpec((tm, cin), lambda i: (i, 0)),
                pl.BlockSpec((cin, cp), lambda i: (0, 0)),
                pl.BlockSpec((1, cp), lambda i: (0, 0)),
            ],
            out_specs=pl.BlockSpec((tm, cp), lambda i: (i, 0)),
        ),
        compiler_params=pltpu.CompilerParams(
            dimension_semantics=("parallel",),
            vmem_limit_bytes=_VMEM_LIMIT),
    )(x_p, w_folded, shift_folded)


# ------- Kernel B: fused batch-masked pairwise distances + streaming top-k (kNN) -------
def _knn_kernel(ps_ref, pt_ref, bs_ref, b_ref, oi_ref, cd_ref, ci_ref):
    j = pl.program_id(1)
    tm = ps_ref.shape[0]          # clusters per block
    tn = pt_ref.shape[1]          # points per block (lane dim, 128-multiple)
    kk = oi_ref.shape[1]          # number of neighbors

    @pl.when(j == 0)
    def _():
        cd_ref[...] = jnp.full(cd_ref.shape, _BIG, jnp.float32)
        ci_ref[...] = jnp.zeros(ci_ref.shape, jnp.int32)

    ps = ps_ref[...]                              # (tm, 3) sampled positions
    pt = pt_ref[...]                              # (3, tn) all positions (transposed)
    d2 = jnp.zeros((tm, tn), jnp.float32)
    for c in range(3):                            # 3 VPU FMAs instead of a K=3 MXU matmul
        diff = ps[:, c:c + 1] - pt[c:c + 1, :]
        d2 = d2 + diff * diff
    same = bs_ref[...] == b_ref[...]              # (tm, 1) == (1, tn) -> (tm, tn)
    d2 = jnp.where(same, d2, _BIG)
    col = lax.broadcasted_iota(jnp.int32, (tm, tn), 1) + j * tn

    # Candidate pool = this tile's distances + running best (kept in scratch cols [tn, tn+kk)).
    cd_ref[:, :tn] = d2
    ci_ref[:, :tn] = col
    cand_d = cd_ref[...]
    cand_i = ci_ref[...]
    cand_if = cand_i.astype(jnp.float32)

    # Exact streaming top-k: k rounds of (min, extract index, consume).
    for jj in range(kk):
        m = jnp.min(cand_d, axis=1, keepdims=True)                         # (tm, 1)
        sel = jnp.min(jnp.where(cand_d == m, cand_if, 3e38),
                      axis=1, keepdims=True).astype(jnp.int32)             # (tm, 1)
        cd_ref[:, tn + jj:tn + jj + 1] = m
        ci_ref[:, tn + jj:tn + jj + 1] = sel
        oi_ref[:, jj:jj + 1] = sel
        consumed = (cand_d == m) & (cand_i == sel)
        cand_d = jnp.where(consumed, jnp.float32(jnp.inf), cand_d)


def knn_topk(sub_pos, sub_batch, pos, batch, *, k):
    m = sub_pos.shape[0]
    n = pos.shape[0]
    tm = min(128, _round_up(m, 8))
    m_pad = _round_up(m, tm)
    tn = min(512, _round_up(n, 128))
    n_pad = _round_up(n, tn)

    sub_pos_p = jnp.pad(sub_pos, ((0, m_pad - m), (0, 0)))
    sub_batch_p = jnp.pad(sub_batch.astype(jnp.int32), (0, m_pad - m),
                          constant_values=-1)[:, None]                     # (m_pad, 1)
    pos_t = jnp.pad(pos.T, ((0, 0), (0, n_pad - n)))                       # (3, n_pad)
    batch_p = jnp.pad(batch.astype(jnp.int32), (0, n_pad - n),
                      constant_values=-2)[None, :]                         # (1, n_pad)

    nbr = pl.pallas_call(
        _knn_kernel,
        out_shape=jax.ShapeDtypeStruct((m_pad, k), jnp.int32),
        grid_spec=pltpu.PrefetchScalarGridSpec(
            num_scalar_prefetch=0,
            grid=(m_pad // tm, n_pad // tn),
            in_specs=[
                pl.BlockSpec((tm, 3), lambda i, j: (i, 0)),
                pl.BlockSpec((3, tn), lambda i, j: (0, j)),
                pl.BlockSpec((tm, 1), lambda i, j: (i, 0)),
                pl.BlockSpec((1, tn), lambda i, j: (0, j)),
            ],
            out_specs=pl.BlockSpec((tm, k), lambda i, j: (i, 0)),
            scratch_shapes=[
                pltpu.VMEM((tm, tn + 128), jnp.float32),   # running candidates + best dists
                pltpu.VMEM((tm, tn + 128), jnp.int32),     # matching point indices
            ],
        ),
        compiler_params=pltpu.CompilerParams(
            dimension_semantics=("parallel", "arbitrary"),
            vmem_limit_bytes=_VMEM_LIMIT),
    )(sub_pos_p, pos_t, sub_batch_p, batch_p)
    # TODO(synk): if a batch holds fewer than k points, the tail neighbors come from other
    # batches (same behavior as the previous top_k-on-masked-distances version).
    return jnp.clip(nbr[:m], 0, n - 1)


# ------- Kernel C: in-kernel neighbor gather (scalar-prefetch index_map) + max reduce -------
def _gather_max_kernel(idx_ref, x_ref, o_ref):
    j = pl.program_id(1)

    @pl.when(j == 0)
    def _():
        o_ref[...] = jnp.full(o_ref.shape, -jnp.inf, jnp.float32)

    o_ref[...] = jnp.maximum(o_ref[...], x_ref[...])


def gather_max(x_rows, nbr_idx):
    n_rows, cp = x_rows.shape
    m, k = nbr_idx.shape
    x3 = x_rows.reshape(n_rows, 1, cp)            # last two dims full -> clean block specs
    out = pl.pallas_call(
        _gather_max_kernel,
        out_shape=jax.ShapeDtypeStruct((m, 1, cp), jnp.float32),
        grid_spec=pltpu.PrefetchScalarGridSpec(
            num_scalar_prefetch=1,                # nbr_idx lands in SMEM
            grid=(m, k),
            in_specs=[pl.BlockSpec((1, 1, cp), lambda i, j, idx: (idx[i, j], 0, 0))],
            out_specs=pl.BlockSpec((1, 1, cp), lambda i, j, idx: (i, 0, 0)),
        ),
        compiler_params=pltpu.CompilerParams(
            dimension_semantics=("parallel", "arbitrary"),
            vmem_limit_bytes=_VMEM_LIMIT),
    )(nbr_idx, x3)
    # TODO(synk): for very large M, batch several neighbor rows per step with manual
    # make_async_copy gathers to amortize the per-grid-step overhead.
    return out.reshape(m, cp)


# ---------------- FPS: sequential data-dependent index selection (plain JAX glue) --------
# TODO(synk): FPS is inherently sequential argmax selection; kept in JAX (no Pallas hot path).
def fps_equal_batches(pos, num_batches, n_sample):
    n = pos.shape[0]
    nb = n // num_batches
    pos_b = pos.reshape(num_batches, nb, 3)

    def one(pb):
        def body(i, state):
            sel, dmin = state
            last_pt = pb[sel[i - 1]]
            d = jnp.sum((pb - last_pt) ** 2, axis=-1)
            dmin = jnp.minimum(dmin, d)
            nxt = jnp.argmax(dmin).astype(jnp.int32)
            return sel.at[i].set(nxt), dmin

        sel0 = jnp.zeros((n_sample,), jnp.int32)
        d0 = jnp.full((nb,), jnp.inf, jnp.float32)
        sel, _ = lax.fori_loop(1, n_sample, body, (sel0, d0))
        return sel

    sel = jax.vmap(one)(pos_b)                                      # (B, n_sample) local
    offs = (jnp.arange(num_batches, dtype=jnp.int32) * nb)[:, None]
    return (sel + offs).reshape(-1)                                 # (M,) global indices


# ---------------- TransitionDown forward ----------------
def transition_down(x, pos, batch, w, b, gamma, beta, running_mean, running_var,
                    *, eps, ratio, k, num_batches):
    n = pos.shape[0]
    c_out = w.shape[1]
    nb = n // num_batches
    n_sample = int(math.ceil(ratio * nb))

    # 1) farthest point sampling
    id_clusters = fps_equal_batches(pos, num_batches, n_sample)     # (M,)
    sub_batch = batch[id_clusters]                                  # (M,)
    sub_pos = pos[id_clusters]                                      # (M, 3)

    # 2) kNN: fused batch-masked pairwise distance + streaming top-k Pallas kernel
    nbr_idx = knn_topk(sub_pos, sub_batch, pos, batch, k=k)         # (M, k)

    # 3) MLP with Linear bias + eval-mode BN folded into (w', shift'); lane-dense channels
    s = gamma / jnp.sqrt(running_var + eps)
    w_f = w * s[None, :]
    shift_f = b * s + beta - running_mean * s
    cp = _round_up(c_out, 128)
    w_p = jnp.pad(w_f, ((0, 0), (0, cp - c_out)))
    shift_p = jnp.pad(shift_f, (0, cp - c_out))[None, :]
    x_mlp = mlp_forward(x, w_p, shift_p)                            # (N_pad, cp)

    # 4) per-cluster neighbor gather + max, entirely in-kernel
    out = gather_max(x_mlp, nbr_idx)[:, :c_out]                     # (M, C_out)
    return out, sub_pos, sub_batch


if __name__ == "__main__":
    key = jax.random.PRNGKey(0)
    k_pos, k_x, k_w, k_b, k_rm, k_rv = jax.random.split(key, 6)

    B = 2          # batches
    N_per = 32     # points per batch
    N = B * N_per  # 64 points total
    C_in = 16
    C_out = 32
    ratio = 0.25   # -> 8 sampled points per batch, M = 16
    k = 16         # neighbors

    pos = jax.random.normal(k_pos, (N, 3), jnp.float32)
    x = jax.random.normal(k_x, (N, C_in), jnp.float32)
    batch = jnp.repeat(jnp.arange(B, dtype=jnp.int32), N_per)

    # Deterministic parameters: MLP([C_in, C_out], plain_last=False) = Linear -> BN -> ReLU
    w = jax.random.normal(k_w, (C_in, C_out), jnp.float32) * 0.1
    b = jax.random.normal(k_b, (C_out,), jnp.float32) * 0.1
    gamma = jnp.ones((C_out,), jnp.float32)
    beta = jnp.zeros((C_out,), jnp.float32)
    running_mean = jax.random.normal(k_rm, (C_out,), jnp.float32) * 0.01
    running_var = 1.0 + 0.1 * jax.random.uniform(k_rv, (C_out,), jnp.float32)
    eps = 1e-5

    out, sub_pos, sub_batch = transition_down(
        x, pos, batch, w, b, gamma, beta, running_mean, running_var,
        eps=eps, ratio=ratio, k=k, num_batches=B)
    jax.block_until_ready((out, sub_pos, sub_batch))

    assert out.shape == (16, C_out)
    assert sub_pos.shape == (16, 3)
    assert sub_batch.shape == (16,)

    # Pure-JAX reference of the same forward (eval-mode BN, unfolded parameters).
    s_ref = gamma / jnp.sqrt(running_var + eps)
    y_ref = jnp.maximum((x @ w + b - running_mean) * s_ref + beta, 0.0)
    d2_ref = jnp.sum((sub_pos[:, None, :] - pos[None, :, :]) ** 2, axis=-1)
    d2_ref = jnp.where(sub_batch[:, None] == batch[None, :], d2_ref, 1e30)
    _, nbr_ref = lax.top_k(-d2_ref, k)
    out_ref = jnp.max(y_ref[nbr_ref], axis=1)
    assert jnp.allclose(out, out_ref, atol=3e-2, rtol=3e-2), \
        float(jnp.max(jnp.abs(out - out_ref)))

    print("KERNEL_OK")
</pallas_src>

<mosaic_0001>
module attributes {stable_mosaic.version = 11 : i64} {
  func.func @_knn_kernel(%arg0: i32, %arg1: i32, %arg2: memref<16x3xf32, #tpu.memory_space<vmem>>, %arg3: memref<3x128xf32, #tpu.memory_space<vmem>>, %arg4: memref<16x1xi32, #tpu.memory_space<vmem>>, %arg5: memref<1x128xi32, #tpu.memory_space<vmem>>, %arg6: memref<16x16xi32, #tpu.memory_space<vmem>>, %arg7: memref<16x256xf32, #tpu.memory_space<vmem>>, %arg8: memref<16x256xi32, #tpu.memory_space<vmem>>) attributes {dimension_semantics = [#tpu.dimension_semantics<parallel>, #tpu.dimension_semantics<arbitrary>], iteration_bounds = array<i64: 1, 1>, scalar_prefetch = 0 : i64, scratch_operands = 2 : i64, tpu.core_type = #tpu.core_type<tc>, window_params = [{transform_indices = @transform_0, window_bounds = array<i64: 16, 3>}, {transform_indices = @transform_1, window_bounds = array<i64: 3, 128>}, {transform_indices = @transform_2, window_bounds = array<i64: 16, 1>}, {transform_indices = @transform_3, window_bounds = array<i64: 1, 128>}, {transform_indices = @transform_4, window_bounds = array<i64: 16, 16>}]} {
    %c0_i32 = arith.constant 0 : i32
    %0 = arith.cmpi eq, %arg1, %c0_i32 : i32
    %1 = arith.extui %0 : i1 to i32
    %c0_i32_0 = arith.constant 0 : i32
    %2 = arith.cmpi ne, %1, %c0_i32_0 : i32
    scf.if %2 {
      %cst_145 = arith.constant 1.000000e+30 : f32
      %340 = vector.broadcast %cst_145 : f32 to vector<16x256xf32>
      %c0_146 = arith.constant 0 : index
      %c0_147 = arith.constant 0 : index
      %341 = vector.load %arg7[%c0_146, %c0_147] : memref<16x256xf32, #tpu.memory_space<vmem>>, vector<16x256xf32>
      tpu.vector_store %arg7[%c0_146, %c0_147], %340 {strides = array<i32>} : memref<16x256xf32, #tpu.memory_space<vmem>>, vector<16x256xf32>,
      %c0_i32_148 = arith.constant 0 : i32
      %342 = vector.broadcast %c0_i32_148 : i32 to vector<16x256xi32>
      %c0_149 = arith.constant 0 : index
      %c0_150 = arith.constant 0 : index
      %343 = vector.load %arg8[%c0_149, %c0_150] : memref<16x256xi32, #tpu.memory_space<vmem>>, vector<16x256xi32>
      tpu.vector_store %arg8[%c0_149, %c0_150], %342 {strides = array<i32>} : memref<16x256xi32, #tpu.memory_space<vmem>>, vector<16x256xi32>,
    } else {
    }
    %c0 = arith.constant 0 : index
    %c0_1 = arith.constant 0 : index
    %3 = vector.load %arg2[%c0, %c0_1] : memref<16x3xf32, #tpu.memory_space<vmem>>, vector<16x3xf32>
    %c0_2 = arith.constant 0 : index
    %c0_3 = arith.constant 0 : index
    %4 = vector.load %arg3[%c0_2, %c0_3] : memref<3x128xf32, #tpu.memory_space<vmem>>, vector<3x128xf32>
    %cst = arith.constant 0.000000e+00 : f32
    %5 = vector.broadcast %cst : f32 to vector<16x128xf32>
    %6 = vector.extract_strided_slice %3 {offsets = [0, 0], sizes = [16, 1], strides = [1, 1]} : vector<16x3xf32> to vector<16x1xf32>
    %7 = vector.extract_strided_slice %4 {offsets = [0, 0], sizes = [1, 128], strides = [1, 1]} : vector<3x128xf32> to vector<1x128xf32>
    %8 = vector.broadcast %6 : vector<16x1xf32> to vector<16x128xf32>
    %9 = vector.broadcast %7 : vector<1x128xf32> to vector<16x128xf32>
    %10 = arith.subf %8, %9 : vector<16x128xf32>
    %11 = arith.mulf %10, %10 : vector<16x128xf32>
    %12 = arith.addf %5, %11 : vector<16x128xf32>
    %13 = vector.extract_strided_slice %3 {offsets = [0, 1], sizes = [16, 1], strides = [1, 1]} : vector<16x3xf32> to vector<16x1xf32>
    %14 = vector.extract_strided_slice %4 {offsets = [1, 0], sizes = [1, 128], strides = [1, 1]} : vector<3x128xf32> to vector<1x128xf32>
    %15 = vector.broadcast %13 : vector<16x1xf32> to vector<16x128xf32>
    %16 = vector.broadcast %14 : vector<1x128xf32> to vector<16x128xf32>
    %17 = arith.subf %15, %16 : vector<16x128xf32>
    %18 = arith.mulf %17, %17 : vector<16x128xf32>
    %19 = arith.addf %12, %18 : vector<16x128xf32>
    %20 = vector.extract_strided_slice %3 {offsets = [0, 2], sizes = [16, 1], strides = [1, 1]} : vector<16x3xf32> to vector<16x1xf32>
    %21 = vector.extract_strided_slice %4 {offsets = [2, 0], sizes = [1, 128], strides = [1, 1]} : vector<3x128xf32> to vector<1x128xf32>
    %22 = vector.broadcast %20 : vector<16x1xf32> to vector<16x128xf32>
    %23 = vector.broadcast %21 : vector<1x128xf32> to vector<16x128xf32>
    %24 = arith.subf %22, %23 : vector<16x128xf32>
    %25 = arith.mulf %24, %24 : vector<16x128xf32>
    %26 = arith.addf %19, %25 : vector<16x128xf32>
    %c0_4 = arith.constant 0 : index
    %c0_5 = arith.constant 0 : index
    %27 = vector.load %arg4[%c0_4, %c0_5] : memref<16x1xi32, #tpu.memory_space<vmem>>, vector<16x1xi32>
    %c0_6 = arith.constant 0 : index
    %c0_7 = arith.constant 0 : index
    %28 = vector.load %arg5[%c0_6, %c0_7] : memref<1x128xi32, #tpu.memory_space<vmem>>, vector<1x128xi32>
    %29 = vector.broadcast %27 : vector<16x1xi32> to vector<16x128xi32>
    %30 = vector.broadcast %28 : vector<1x128xi32> to vector<16x128xi32>
    %31 = arith.cmpi eq, %29, %30 : vector<16x128xi32>
    %cst_8 = arith.constant 1.000000e+30 : f32
    %32 = vector.broadcast %cst_8 : f32 to vector<16x128xf32>
    %33 = arith.select %31, %26, %32 : vector<16x128xi1>, vector<16x128xf32>
    %34 = tpu.iota {dimensions = array<i32: 1>} : vector<16x128xi32>
    %c128_i32 = arith.constant 128 : i32
    %35 = arith.muli %arg1, %c128_i32 : i32
    %36 = vector.broadcast %35 : i32 to vector<16x128xi32>
    %37 = arith.addi %34, %36 : vector<16x128xi32>
    %c0_9 = arith.constant 0 : index
    %c0_10 = arith.constant 0 : index
    %38 = vector.load %arg7[%c0_9, %c0_10] : memref<16x256xf32, #tpu.memory_space<vmem>>, vector<16x128xf32>
    tpu.vector_store %arg7[%c0_9, %c0_10], %33 {strides = array<i32>} : memref<16x256xf32, #tpu.memory_space<vmem>>, vector<16x128xf32>,
    %c0_11 = arith.constant 0 : index
    %c0_12 = arith.constant 0 : index
    %39 = vector.load %arg8[%c0_11, %c0_12] : memref<16x256xi32, #tpu.memory_space<vmem>>, vector<16x128xi32>
    tpu.vector_store %arg8[%c0_11, %c0_12], %37 {strides = array<i32>} : memref<16x256xi32, #tpu.memory_space<vmem>>, vector<16x128xi32>,
    %c0_13 = arith.constant 0 : index
    %c0_14 = arith.constant 0 : index
    %40 = vector.load %arg7[%c0_13, %c0_14] : memref<16x256xf32, #tpu.memory_space<vmem>>, vector<16x256xf32>
    %c0_15 = arith.constant 0 : index
    %c0_16 = arith.constant 0 : index
    %41 = vector.load %arg8[%c0_15, %c0_16] : memref<16x256xi32, #tpu.memory_space<vmem>>, vector<16x256xi32>
    %42 = arith.sitofp %41 : vector<16x256xi32> to vector<16x256xf32>
    %cst_17 = arith.constant dense<0x7F800000> : vector<16xf32>
    %43 = vector.multi_reduction <minimumf>, %40, %cst_17 [1] : vector<16x256xf32> to vector<16xf32>
    %44 = vector.shape_cast %43 : vector<16xf32> to vector<16x1xf32>
    %45 = vector.broadcast %44 : vector<16x1xf32> to vector<16x256xf32>
    %46 = arith.cmpf oeq, %40, %45 : vector<16x256xf32>
    %cst_18 = arith.constant 3.000000e+38 : f32
    %47 = vector.broadcast %cst_18 : f32 to vector<16x256xf32>
    %48 = arith.select %46, %42, %47 : vector<16x256xi1>, vector<16x256xf32>
    %cst_19 = arith.constant dense<0x7F800000> : vector<16xf32>
    %49 = vector.multi_reduction <minimumf>, %48, %cst_19 [1] : vector<16x256xf32> to vector<16xf32>
    %50 = vector.shape_cast %49 : vector<16xf32> to vector<16x1xf32>
    %51 = arith.fptosi %50 : vector<16x1xf32> to vector<16x1xi32>
    %c0_20 = arith.constant 0 : index
    %c128 = arith.constant 128 : index
    %52 = vector.load %arg7[%c0_20, %c128] : memref<16x256xf32, #tpu.memory_space<vmem>>, vector<16x1xf32>
    tpu.vector_store %arg7[%c0_20, %c128], %44 {strides = array<i32>} : memref<16x256xf32, #tpu.memory_space<vmem>>, vector<16x1xf32>,
    %c0_21 = arith.constant 0 : index
    %c128_22 = arith.constant 128 : index
    %53 = vector.load %arg8[%c0_21, %c128_22] : memref<16x256xi32, #tpu.memory_space<vmem>>, vector<16x1xi32>
    tpu.vector_store %arg8[%c0_21, %c128_22], %51 {strides = array<i32>} : memref<16x256xi32, #tpu.memory_space<vmem>>, vector<16x1xi32>,
    %c0_23 = arith.constant 0 : index
    %c0_24 = arith.constant 0 : index
    %54 = vector.load %arg6[%c0_23, %c0_24] : memref<16x16xi32, #tpu.memory_space<vmem>>, vector<16x1xi32>
    tpu.vector_store %arg6[%c0_23, %c0_24], %51 {strides = array<i32>} : memref<16x16xi32, #tpu.memory_space<vmem>>, vector<16x1xi32>,
    %55 = vector.broadcast %44 : vector<16x1xf32> to vector<16x256xf32>
    %56 = arith.cmpf oeq, %40, %55 : vector<16x256xf32>
    %57 = vector.broadcast %51 : vector<16x1xi32> to vector<16x256xi32>
    %58 = arith.cmpi eq, %41, %57 : vector<16x256xi32>
    %59 = arith.andi %56, %58 : vector<16x256xi1>
    %cst_25 = arith.constant 0x7F800000 : f32
    %60 = vector.broadcast %cst_25 : f32 to vector<16x256xf32>
    %61 = arith.select %59, %60, %40 : vector<16x256xi1>, vector<16x256xf32>
    %cst_26 = arith.constant dense<0x7F800000> : vector<16xf32>
    %62 = vector.multi_reduction <minimumf>, %61, %cst_26 [1] : vector<16x256xf32> to vector<16xf32>
    %63 = vector.shape_cast %62 : vector<16xf32> to vector<16x1xf32>
    %64 = vector.broadcast %63 : vector<16x1xf32> to vector<16x256xf32>
    %65 = arith.cmpf oeq, %61, %64 : vector<16x256xf32>
    %cst_27 = arith.constant 3.000000e+38 : f32
    %66 = vector.broadcast %cst_27 : f32 to vector<16x256xf32>
    %67 = arith.select %65, %42, %66 : vector<16x256xi1>, vector<16x256xf32>
    %cst_28 = arith.constant dense<0x7F800000> : vector<16xf32>
    %68 = vector.multi_reduction <minimumf>, %67, %cst_28 [1] : vector<16x256xf32> to vector<16xf32>
    %69 = vector.shape_cast %68 : vector<16xf32> to vector<16x1xf32>
    %70 = arith.fptosi %69 : vector<16x1xf32> to vector<16x1xi32>
    %c0_29 = arith.constant 0 : index
    %c129 = arith.constant 129 : index
    %71 = vector.load %arg7[%c0_29, %c129] : memref<16x256xf32, #tpu.memory_space<vmem>>, vector<16x1xf32>
    tpu.vector_store %arg7[%c0_29, %c129], %63 {strides = array<i32>} : memref<16x256xf32, #tpu.memory_space<vmem>>, vector<16x1xf32>,
    %c0_30 = arith.constant 0 : index
    %c129_31 = arith.constant 129 : index
    %72 = vector.load %arg8[%c0_30, %c129_31] : memref<16x256xi32, #tpu.memory_space<vmem>>, vector<16x1xi32>
    tpu.vector_store %arg8[%c0_30, %c129_31], %70 {strides = array<i32>} : memref<16x256xi32, #tpu.memory_space<vmem>>, vector<16x1xi32>,
    %c0_32 = arith.constant 0 : index
    %c1 = arith.constant 1 : index
    %73 = vector.load %arg6[%c0_32, %c1] : memref<16x16xi32, #tpu.memory_space<vmem>>, vector<16x1xi32>
    tpu.vector_store %arg6[%c0_32, %c1], %70 {strides = array<i32>} : memref<16x16xi32, #tpu.memory_space<vmem>>, vector<16x1xi32>,
    %74 = vector.broadcast %63 : vector<16x1xf32> to vector<16x256xf32>
    %75 = arith.cmpf oeq, %61, %74 : vector<16x256xf32>
    %76 = vector.broadcast %70 : vector<16x1xi32> to vector<16x256xi32>
    %77 = arith.cmpi eq, %41, %76 : vector<16x256xi32>
    %78 = arith.andi %75, %77 : vector<16x256xi1>
    %cst_33 = arith.constant 0x7F800000 : f32
    %79 = vector.broadcast %cst_33 : f32 to vector<16x256xf32>
    %80 = arith.select %78, %79, %61 : vector<16x256xi1>, vector<16x256xf32>
    %cst_34 = arith.constant dense<0x7F800000> : vector<16xf32>
    %81 = vector.multi_reduction <minimumf>, %80, %cst_34 [1] : vector<16x256xf32> to vector<16xf32>
    %82 = vector.shape_cast %81 : vector<16xf32> to vector<16x1xf32>
    %83 = vector.broadcast %82 : vector<16x1xf32> to vector<16x256xf32>
    %84 = arith.cmpf oeq, %80, %83 : vector<16x256xf32>
    %cst_35 = arith.constant 3.000000e+38 : f32
    %85 = vector.broadcast %cst_35 : f32 to vector<16x256xf32>
    %86 = arith.select %84, %42, %85 : vector<16x256xi1>, vector<16x256xf32>
    %cst_36 = arith.constant dense<0x7F800000> : vector<16xf32>
    %87 = vector.multi_reduction <minimumf>, %86, %cst_36 [1] : vector<16x256xf32> to vector<16xf32>
    %88 = vector.shape_cast %87 : vector<16xf32> to vector<16x1xf32>
    %89 = arith.fptosi %88 : vector<16x1xf32> to vector<16x1xi32>
    %c0_37 = arith.constant 0 : index
    %c130 = arith.constant 130 : index
    %90 = vector.load %arg7[%c0_37, %c130] : memref<16x256xf32, #tpu.memory_space<vmem>>, vector<16x1xf32>
    tpu.vector_store %arg7[%c0_37, %c130], %82 {strides = array<i32>} : memref<16x256xf32, #tpu.memory_space<vmem>>, vector<16x1xf32>,
    %c0_38 = arith.constant 0 : index
    %c130_39 = arith.constant 130 : index
    %91 = vector.load %arg8[%c0_38, %c130_39] : memref<16x256xi32, #tpu.memory_space<vmem>>, vector<16x1xi32>
    tpu.vector_store %arg8[%c0_38, %c130_39], %89 {strides = array<i32>} : memref<16x256xi32, #tpu.memory_space<vmem>>, vector<16x1xi32>,
    %c0_40 = arith.constant 0 : index
    %c2 = arith.constant 2 : index
    %92 = vector.load %arg6[%c0_40, %c2] : memref<16x16xi32, #tpu.memory_space<vmem>>, vector<16x1xi32>
    tpu.vector_store %arg6[%c0_40, %c2], %89 {strides = array<i32>} : memref<16x16xi32, #tpu.memory_space<vmem>>, vector<16x1xi32>,
    %93 = vector.broadcast %82 : vector<16x1xf32> to vector<16x256xf32>
    %94 = arith.cmpf oeq, %80, %93 : vector<16x256xf32>
    %95 = vector.broadcast %89 : vector<16x1xi32> to vector<16x256xi32>
    %96 = arith.cmpi eq, %41, %95 : vector<16x256xi32>
    %97 = arith.andi %94, %96 : vector<16x256xi1>
    %cst_41 = arith.constant 0x7F800000 : f32
    %98 = vector.broadcast %cst_41 : f32 to vector<16x256xf32>
    %99 = arith.select %97, %98, %80 : vector<16x256xi1>, vector<16x256xf32>
    %cst_42 = arith.constant dense<0x7F800000> : vector<16xf32>
    %100 = vector.multi_reduction <minimumf>, %99, %cst_42 [1] : vector<16x256xf32> to vector<16xf32>
    %101 = vector.shape_cast %100 : vector<16xf32> to vector<16x1xf32>
    %102 = vector.broadcast %101 : vector<16x1xf32> to vector<16x256xf32>
    %103 = arith.cmpf oeq, %99, %102 : vector<16x256xf32>
    %cst_43 = arith.constant 3.000000e+38 : f32
    %104 = vector.broadcast %cst_43 : f32 to vector<16x256xf32>
    %105 = arith.select %103, %42, %104 : vector<16x256xi1>, vector<16x256xf32>
    %cst_44 = arith.constant dense<0x7F800000> : vector<16xf32>
    %106 = vector.multi_reduction <minimumf>, %105, %cst_44 [1] : vector<16x256xf32> to vector<16xf32>
    %107 = vector.shape_cast %106 : vector<16xf32> to vector<16x1xf32>
    %108 = arith.fptosi %107 : vector<16x1xf32> to vector<16x1xi32>
    %c0_45 = arith.constant 0 : index
    %c131 = arith.constant 131 : index
    %109 = vector.load %arg7[%c0_45, %c131] : memref<16x256xf32, #tpu.memory_space<vmem>>, vector<16x1xf32>
    tpu.vector_store %arg7[%c0_45, %c131], %101 {strides = array<i32>} : memref<16x256xf32, #tpu.memory_space<vmem>>, vector<16x1xf32>,
    %c0_46 = arith.constant 0 : index
    %c131_47 = arith.constant 131 : index
    %110 = vector.load %arg8[%c0_46, %c131_47] : memref<16x256xi32, #tpu.memory_space<vmem>>, vector<16x1xi32>
    tpu.vector_store %arg8[%c0_46, %c131_47], %108 {strides = array<i32>} : memref<16x256xi32, #tpu.memory_space<vmem>>, vector<16x1xi32>,
    %c0_48 = arith.constant 0 : index
    %c3 = arith.constant 3 : index
    %111 = vector.load %arg6[%c0_48, %c3] : memref<16x16xi32, #tpu.memory_space<vmem>>, vector<16x1xi32>
    tpu.vector_store %arg6[%c0_48, %c3], %108 {strides = array<i32>} : memref<16x16xi32, #tpu.memory_space<vmem>>, vector<16x1xi32>,
    %112 = vector.broadcast %101 : vector<16x1xf32> to vector<16x256xf32>
    %113 = arith.cmpf oeq, %99, %112 : vector<16x256xf32>
    %114 = vector.broadcast %108 : vector<16x1xi32> to vector<16x256xi32>
    %115 = arith.cmpi eq, %41, %114 : vector<16x256xi32>
    %116 = arith.andi %113, %115 : vector<16x256xi1>
    %cst_49 = arith.constant 0x7F800000 : f32
    %117 = vector.broadcast %cst_49 : f32 to vector<16x256xf32>
    %118 = arith.select %116, %117, %99 : vector<16x256xi1>, vector<16x256xf32>
    %cst_50 = arith.constant dense<0x7F800000> : vector<16xf32>
    %119 = vector.multi_reduction <minimumf>, %118, %cst_50 [1] : vector<16x256xf32> to vector<16xf32>
    %120 = vector.shape_cast %119 : vector<16xf32> to vector<16x1xf32>
    %121 = vector.broadcast %120 : vector<16x1xf32> to vector<16x256xf32>
    %122 = arith.cmpf oeq, %118, %121 : vector<16x256xf32>
    %cst_51 = arith.constant 3.000000e+38 : f32
    %123 = vector.broadcast %cst_51 : f32 to vector<16x256xf32>
    %124 = arith.select %122, %42, %123 : vector<16x256xi1>, vector<16x256xf32>
    %cst_52 = arith.constant dense<0x7F800000> : vector<16xf32>
    %125 = vector.multi_reduction <minimumf>, %124, %cst_52 [1] : vector<16x256xf32> to vector<16xf32>
    %126 = vector.shape_cast %125 : vector<16xf32> to vector<16x1xf32>
    %127 = arith.fptosi %126 : vector<16x1xf32> to vector<16x1xi32>
    %c0_53 = arith.constant 0 : index
    %c132 = arith.constant 132 : index
    %128 = vector.load %arg7[%c0_53, %c132] : memref<16x256xf32, #tpu.memory_space<vmem>>, vector<16x1xf32>
    tpu.vector_store %arg7[%c0_53, %c132], %120 {strides = array<i32>} : memref<16x256xf32, #tpu.memory_space<vmem>>, vector<16x1xf32>,
    %c0_54 = arith.constant 0 : index
    %c132_55 = arith.constant 132 : index
    %129 = vector.load %arg8[%c0_54, %c132_55] : memref<16x256xi32, #tpu.memory_space<vmem>>, vector<16x1xi32>
    tpu.vector_store %arg8[%c0_54, %c132_55], %127 {strides = array<i32>} : memref<16x256xi32, #tpu.memory_space<vmem>>, vector<16x1xi32>,
    %c0_56 = arith.constant 0 : index
    %c4 = arith.constant 4 : index
    %130 = vector.load %arg6[%c0_56, %c4] : memref<16x16xi32, #tpu.memory_space<vmem>>, vector<16x1xi32>
    tpu.vector_store %arg6[%c0_56, %c4], %127 {strides = array<i32>} : memref<16x16xi32, #tpu.memory_space<vmem>>, vector<16x1xi32>,
    %131 = vector.broadcast %120 : vector<16x1xf32> to vector<16x256xf32>
    %132 = arith.cmpf oeq, %118, %131 : vector<16x256xf32>
    %133 = vector.broadcast %127 : vector<16x1xi32> to vector<16x256xi32>
    %134 = arith.cmpi eq, %41, %133 : vector<16x256xi32>
    %135 = arith.andi %132, %134 : vector<16x256xi1>
    %cst_57 = arith.constant 0x7F800000 : f32
    %136 = vector.broadcast %cst_57 : f32 to vector<16x256xf32>
    %137 = arith.select %135, %136, %118 : vector<16x256xi1>, vector<16x256xf32>
    %cst_58 = arith.constant dense<0x7F800000> : vector<16xf32>
    %138 = vector.multi_reduction <minimumf>, %137, %cst_58 [1] : vector<16x256xf32> to vector<16xf32>
    %139 = vector.shape_cast %138 : vector<16xf32> to vector<16x1xf32>
    %140 = vector.broadcast %139 : vector<16x1xf32> to vector<16x256xf32>
    %141 = arith.cmpf oeq, %137, %140 : vector<16x256xf32>
    %cst_59 = arith.constant 3.000000e+38 : f32
    %142 = vector.broadcast %cst_59 : f32 to vector<16x256xf32>
    %143 = arith.select %141, %42, %142 : vector<16x256xi1>, vector<16x256xf32>
    %cst_60 = arith.constant dense<0x7F800000> : vector<16xf32>
    %144 = vector.multi_reduction <minimumf>, %143, %cst_60 [1] : vector<16x256xf32> to vector<16xf32>
    %145 = vector.shape_cast %144 : vector<16xf32> to vector<16x1xf32>
    %146 = arith.fptosi %145 : vector<16x1xf32> to vector<16x1xi32>
    %c0_61 = arith.constant 0 : index
    %c133 = arith.constant 133 : index
    %147 = vector.load %arg7[%c0_61, %c133] : memref<16x256xf32, #tpu.memory_space<vmem>>, vector<16x1xf32>
    tpu.vector_store %arg7[%c0_61, %c133], %139 {strides = array<i32>} : memref<16x256xf32, #tpu.memory_space<vmem>>, vector<16x1xf32>,
    %c0_62 = arith.constant 0 : index
    %c133_63 = arith.constant 133 : index
    %148 = vector.load %arg8[%c0_62, %c133_63] : memref<16x256xi32, #tpu.memory_space<vmem>>, vector<16x1xi32>
    tpu.vector_store %arg8[%c0_62, %c133_63], %146 {strides = array<i32>} : memref<16x256xi32, #tpu.memory_space<vmem>>, vector<16x1xi32>,
    %c0_64 = arith.constant 0 : index
    %c5 = arith.constant 5 : index
    %149 = vector.load %arg6[%c0_64, %c5] : memref<16x16xi32, #tpu.memory_space<vmem>>, vector<16x1xi32>
    tpu.vector_store %arg6[%c0_64, %c5], %146 {strides = array<i32>} : memref<16x16xi32, #tpu.memory_space<vmem>>, vector<16x1xi32>,
    %150 = vector.broadcast %139 : vector<16x1xf32> to vector<16x256xf32>
    %151 = arith.cmpf oeq, %137, %150 : vector<16x256xf32>
    %152 = vector.broadcast %146 : vector<16x1xi32> to vector<16x256xi32>
    %153 = arith.cmpi eq, %41, %152 : vector<16x256xi32>
    %154 = arith.andi %151, %153 : vector<16x256xi1>
    %cst_65 = arith.constant 0x7F800000 : f32
    %155 = vector.broadcast %cst_65 : f32 to vector<16x256xf32>
    %156 = arith.select %154, %155, %137 : vector<16x256xi1>, vector<16x256xf32>
    %cst_66 = arith.constant dense<0x7F800000> : vector<16xf32>
    %157 = vector.multi_reduction <minimumf>, %156, %cst_66 [1] : vector<16x256xf32> to vector<16xf32>
    %158 = vector.shape_cast %157 : vector<16xf32> to vector<16x1xf32>
    %159 = vector.broadcast %158 : vector<16x1xf32> to vector<16x256xf32>
    %160 = arith.cmpf oeq, %156, %159 : vector<16x256xf32>
    %cst_67 = arith.constant 3.000000e+38 : f32
    %161 = vector.broadcast %cst_67 : f32 to vector<16x256xf32>
    %162 = arith.select %160, %42, %161 : vector<16x256xi1>, vector<16x256xf32>
    %cst_68 = arith.constant dense<0x7F800000> : vector<16xf32>
    %163 = vector.multi_reduction <minimumf>, %162, %cst_68 [1] : vector<16x256xf32> to vector<16xf32>
    %164 = vector.shape_cast %163 : vector<16xf32> to vector<16x1xf32>
    %165 = arith.fptosi %164 : vector<16x1xf32> to vector<16x1xi32>
    %c0_69 = arith.constant 0 : index
    %c134 = arith.constant 134 : index
    %166 = vector.load %arg7[%c0_69, %c134] : memref<16x256xf32, #tpu.memory_space<vmem>>, vector<16x1xf32>
    tpu.vector_store %arg7[%c0_69, %c134], %158 {strides = array<i32>} : memref<16x256xf32, #tpu.memory_space<vmem>>, vector<16x1xf32>,
    %c0_70 = arith.constant 0 : index
    %c134_71 = arith.constant 134 : index
    %167 = vector.load %arg8[%c0_70, %c134_71] : memref<16x256xi32, #tpu.memory_space<vmem>>, vector<16x1xi32>
    tpu.vector_store %arg8[%c0_70, %c134_71], %165 {strides = array<i32>} : memref<16x256xi32, #tpu.memory_space<vmem>>, vector<16x1xi32>,
    %c0_72 = arith.constant 0 : index
    %c6 = arith.constant 6 : index
    %168 = vector.load %arg6[%c0_72, %c6] : memref<16x16xi32, #tpu.memory_space<vmem>>, vector<16x1xi32>
    tpu.vector_store %arg6[%c0_72, %c6], %165 {strides = array<i32>} : memref<16x16xi32, #tpu.memory_space<vmem>>, vector<16x1xi32>,
    %169 = vector.broadcast %158 : vector<16x1xf32> to vector<16x256xf32>
    %170 = arith.cmpf oeq, %156, %169 : vector<16x256xf32>
    %171 = vector.broadcast %165 : vector<16x1xi32> to vector<16x256xi32>
    %172 = arith.cmpi eq, %41, %171 : vector<16x256xi32>
    %173 = arith.andi %170, %172 : vector<16x256xi1>
    %cst_73 = arith.constant 0x7F800000 : f32
    %174 = vector.broadcast %cst_73 : f32 to vector<16x256xf32>
    %175 = arith.select %173, %174, %156 : vector<16x256xi1>, vector<16x256xf32>
    %cst_74 = arith.constant dense<0x7F800000> : vector<16xf32>
    %176 = vector.multi_reduction <minimumf>, %175, %cst_74 [1] : vector<16x256xf32> to vector<16xf32>
    %177 = vector.shape_cast %176 : vector<16xf32> to vector<16x1xf32>
    %178 = vector.broadcast %177 : vector<16x1xf32> to vector<16x256xf32>
    %179 = arith.cmpf oeq, %175, %178 : vector<16x256xf32>
    %cst_75 = arith.constant 3.000000e+38 : f32
    %180 = vector.broadcast %cst_75 : f32 to vector<16x256xf32>
    %181 = arith.select %179, %42, %180 : vector<16x256xi1>, vector<16x256xf32>
    %cst_76 = arith.constant dense<0x7F800000> : vector<16xf32>
    %182 = vector.multi_reduction <minimumf>, %181, %cst_76 [1] : vector<16x256xf32> to vector<16xf32>
    %183 = vector.shape_cast %182 : vector<16xf32> to vector<16x1xf32>
    %184 = arith.fptosi %183 : vector<16x1xf32> to vector<16x1xi32>
    %c0_77 = arith.constant 0 : index
    %c135 = arith.constant 135 : index
    %185 = vector.load %arg7[%c0_77, %c135] : memref<16x256xf32, #tpu.memory_space<vmem>>, vector<16x1xf32>
    tpu.vector_store %arg7[%c0_77, %c135], %177 {strides = array<i32>} : memref<16x256xf32, #tpu.memory_space<vmem>>, vector<16x1xf32>,
    %c0_78 = arith.constant 0 : index
    %c135_79 = arith.constant 135 : index
    %186 = vector.load %arg8[%c0_78, %c135_79] : memref<16x256xi32, #tpu.memory_space<vmem>>, vector<16x1xi32>
    tpu.vector_store %arg8[%c0_78, %c135_79], %184 {strides = array<i32>} : memref<16x256xi32, #tpu.memory_space<vmem>>, vector<16x1xi32>,
    %c0_80 = arith.constant 0 : index
    %c7 = arith.constant 7 : index
    %187 = vector.load %arg6[%c0_80, %c7] : memref<16x16xi32, #tpu.memory_space<vmem>>, vector<16x1xi32>
    tpu.vector_store %arg6[%c0_80, %c7], %184 {strides = array<i32>} : memref<16x16xi32, #tpu.memory_space<vmem>>, vector<16x1xi32>,
    %188 = vector.broadcast %177 : vector<16x1xf32> to vector<16x256xf32>
    %189 = arith.cmpf oeq, %175, %188 : vector<16x256xf32>
    %190 = vector.broadcast %184 : vector<16x1xi32> to vector<16x256xi32>
    %191 = arith.cmpi eq, %41, %190 : vector<16x256xi32>
    %192 = arith.andi %189, %191 : vector<16x256xi1>
    %cst_81 = arith.constant 0x7F800000 : f32
    %193 = vector.broadcast %cst_81 : f32 to vector<16x256xf32>
    %194 = arith.select %192, %193, %175 : vector<16x256xi1>, vector<16x256xf32>
    %cst_82 = arith.constant dense<0x7F800000> : vector<16xf32>
    %195 = vector.multi_reduction <minimumf>, %194, %cst_82 [1] : vector<16x256xf32> to vector<16xf32>
    %196 = vector.shape_cast %195 : vector<16xf32> to vector<16x1xf32>
    %197 = vector.broadcast %196 : vector<16x1xf32> to vector<16x256xf32>
    %198 = arith.cmpf oeq, %194, %197 : vector<16x256xf32>
    %cst_83 = arith.constant 3.000000e+38 : f32
    %199 = vector.broadcast %cst_83 : f32 to vector<16x256xf32>
    %200 = arith.select %198, %42, %199 : vector<16x256xi1>, vector<16x256xf32>
    %cst_84 = arith.constant dense<0x7F800000> : vector<16xf32>
    %201 = vector.multi_reduction <minimumf>, %200, %cst_84 [1] : vector<16x256xf32> to vector<16xf32>
    %202 = vector.shape_cast %201 : vector<16xf32> to vector<16x1xf32>
    %203 = arith.fptosi %202 : vector<16x1xf32> to vector<16x1xi32>
    %c0_85 = arith.constant 0 : index
    %c136 = arith.constant 136 : index
    %204 = vector.load %arg7[%c0_85, %c136] : memref<16x256xf32, #tpu.memory_space<vmem>>, vector<16x1xf32>
    tpu.vector_store %arg7[%c0_85, %c136], %196 {strides = array<i32>} : memref<16x256xf32, #tpu.memory_space<vmem>>, vector<16x1xf32>,
    %c0_86 = arith.constant 0 : index
    %c136_87 = arith.constant 136 : index
    %205 = vector.load %arg8[%c0_86, %c136_87] : memref<16x256xi32, #tpu.memory_space<vmem>>, vector<16x1xi32>
    tpu.vector_store %arg8[%c0_86, %c136_87], %203 {strides = array<i32>} : memref<16x256xi32, #tpu.memory_space<vmem>>, vector<16x1xi32>,
    %c0_88 = arith.constant 0 : index
    %c8 = arith.constant 8 : index
    %206 = vector.load %arg6[%c0_88, %c8] : memref<16x16xi32, #tpu.memory_space<vmem>>, vector<16x1xi32>
    tpu.vector_store %arg6[%c0_88, %c8], %203 {strides = array<i32>} : memref<16x16xi32, #tpu.memory_space<vmem>>, vector<16x1xi32>,
    %207 = vector.broadcast %196 : vector<16x1xf32> to vector<16x256xf32>
    %208 = arith.cmpf oeq, %194, %207 : vector<16x256xf32>
    %209 = vector.broadcast %203 : vector<16x1xi32> to vector<16x256xi32>
    %210 = arith.cmpi eq, %41, %209 : vector<16x256xi32>
    %211 = arith.andi %208, %210 : vector<16x256xi1>
    %cst_89 = arith.constant 0x7F800000 : f32
    %212 = vector.broadcast %cst_89 : f32 to vector<16x256xf32>
    %213 = arith.select %211, %212, %194 : vector<16x256xi1>, vector<16x256xf32>
    %cst_90 = arith.constant dense<0x7F800000> : vector<16xf32>
    %214 = vector.multi_reduction <minimumf>, %213, %cst_90 [1] : vector<16x256xf32> to vector<16xf32>
    %215 = vector.shape_cast %214 : vector<16xf32> to vector<16x1xf32>
    %216 = vector.broadcast %215 : vector<16x1xf32> to vector<16x256xf32>
    %217 = arith.cmpf oeq, %213, %216 : vector<16x256xf32>
    %cst_91 = arith.constant 3.000000e+38 : f32
    %218 = vector.broadcast %cst_91 : f32 to vector<16x256xf32>
    %219 = arith.select %217, %42, %218 : vector<16x256xi1>, vector<16x256xf32>
    %cst_92 = arith.constant dense<0x7F800000> : vector<16xf32>
    %220 = vector.multi_reduction <minimumf>, %219, %cst_92 [1] : vector<16x256xf32> to vector<16xf32>
    %221 = vector.shape_cast %220 : vector<16xf32> to vector<16x1xf32>
    %222 = arith.fptosi %221 : vector<16x1xf32> to vector<16x1xi32>
    %c0_93 = arith.constant 0 : index
    %c137 = arith.constant 137 : index
    %223 = vector.load %arg7[%c0_93, %c137] : memref<16x256xf32, #tpu.memory_space<vmem>>, vector<16x1xf32>
    tpu.vector_store %arg7[%c0_93, %c137], %215 {strides = array<i32>} : memref<16x256xf32, #tpu.memory_space<vmem>>, vector<16x1xf32>,
    %c0_94 = arith.constant 0 : index
    %c137_95 = arith.constant 137 : index
    %224 = vector.load %arg8[%c0_94, %c137_95] : memref<16x256xi32, #tpu.memory_space<vmem>>, vector<16x1xi32>
    tpu.vector_store %arg8[%c0_94, %c137_95], %222 {strides = array<i32>} : memref<16x256xi32, #tpu.memory_space<vmem>>, vector<16x1xi32>,
    %c0_96 = arith.constant 0 : index
    %c9 = arith.constant 9 : index
    %225 = vector.load %arg6[%c0_96, %c9] : memref<16x16xi32, #tpu.memory_space<vmem>>, vector<16x1xi32>
    tpu.vector_store %arg6[%c0_96, %c9], %222 {strides = array<i32>} : memref<16x16xi32, #tpu.memory_space<vmem>>, vector<16x1xi32>,
    %226 = vector.broadcast %215 : vector<16x1xf32> to vector<16x256xf32>
    %227 = arith.cmpf oeq, %213, %226 : vector<16x256xf32>
    %228 = vector.broadcast %222 : vector<16x1xi32> to vector<16x256xi32>
    %229 = arith.cmpi eq, %41, %228 : vector<16x256xi32>
    %230 = arith.andi %227, %229 : vector<16x256xi1>
    %cst_97 = arith.constant 0x7F800000 : f32
    %231 = vector.broadcast %cst_97 : f32 to vector<16x256xf32>
    %232 = arith.select %230, %231, %213 : vector<16x256xi1>, vector<16x256xf32>
    %cst_98 = arith.constant dense<0x7F800000> : vector<16xf32>
    %233 = vector.multi_reduction <minimumf>, %232, %cst_98 [1] : vector<16x256xf32> to vector<16xf32>
    %234 = vector.shape_cast %233 : vector<16xf32> to vector<16x1xf32>
    %235 = vector.broadcast %234 : vector<16x1xf32> to vector<16x256xf32>
    %236 = arith.cmpf oeq, %232, %235 : vector<16x256xf32>
    %cst_99 = arith.constant 3.000000e+38 : f32
    %237 = vector.broadcast %cst_99 : f32 to vector<16x256xf32>
    %238 = arith.select %236, %42, %237 : vector<16x256xi1>, vector<16x256xf32>
    %cst_100 = arith.constant dense<0x7F800000> : vector<16xf32>
    %239 = vector.multi_reduction <minimumf>, %238, %cst_100 [1] : vector<16x256xf32> to vector<16xf32>
    %240 = vector.shape_cast %239 : vector<16xf32> to vector<16x1xf32>
    %241 = arith.fptosi %240 : vector<16x1xf32> to vector<16x1xi32>
    %c0_101 = arith.constant 0 : index
    %c138 = arith.constant 138 : index
    %242 = vector.load %arg7[%c0_101, %c138] : memref<16x256xf32, #tpu.memory_space<vmem>>, vector<16x1xf32>
    tpu.vector_store %arg7[%c0_101, %c138], %234 {strides = array<i32>} : memref<16x256xf32, #tpu.memory_space<vmem>>, vector<16x1xf32>,
    %c0_102 = arith.constant 0 : index
    %c138_103 = arith.constant 138 : index
    %243 = vector.load %arg8[%c0_102, %c138_103] : memref<16x256xi32, #tpu.memory_space<vmem>>, vector<16x1xi32>
    tpu.vector_store %arg8[%c0_102, %c138_103], %241 {strides = array<i32>} : memref<16x256xi32, #tpu.memory_space<vmem>>, vector<16x1xi32>,
    %c0_104 = arith.constant 0 : index
    %c10 = arith.constant 10 : index
    %244 = vector.load %arg6[%c0_104, %c10] : memref<16x16xi32, #tpu.memory_space<vmem>>, vector<16x1xi32>
    tpu.vector_store %arg6[%c0_104, %c10], %241 {strides = array<i32>} : memref<16x16xi32, #tpu.memory_space<vmem>>, vector<16x1xi32>,
    %245 = vector.broadcast %234 : vector<16x1xf32> to vector<16x256xf32>
    %246 = arith.cmpf oeq, %232, %245 : vector<16x256xf32>
    %247 = vector.broadcast %241 : vector<16x1xi32> to vector<16x256xi32>
    %248 = arith.cmpi eq, %41, %247 : vector<16x256xi32>
    %249 = arith.andi %246, %248 : vector<16x256xi1>
    %cst_105 = arith.constant 0x7F800000 : f32
    %250 = vector.broadcast %cst_105 : f32 to vector<16x256xf32>
    %251 = arith.select %249, %250, %232 : vector<16x256xi1>, vector<16x256xf32>
    %cst_106 = arith.constant dense<0x7F800000> : vector<16xf32>
    %252 = vector.multi_reduction <minimumf>, %251, %cst_106 [1] : vector<16x256xf32> to vector<16xf32>
    %253 = vector.shape_cast %252 : vector<16xf32> to vector<16x1xf32>
    %254 = vector.broadcast %253 : vector<16x1xf32> to vector<16x256xf32>
    %255 = arith.cmpf oeq, %251, %254 : vector<16x256xf32>
    %cst_107 = arith.constant 3.000000e+38 : f32
    %256 = vector.broadcast %cst_107 : f32 to vector<16x256xf32>
    %257 = arith.select %255, %42, %256 : vector<16x256xi1>, vector<16x256xf32>
    %cst_108 = arith.constant dense<0x7F800000> : vector<16xf32>
    %258 = vector.multi_reduction <minimumf>, %257, %cst_108 [1] : vector<16x256xf32> to vector<16xf32>
    %259 = vector.shape_cast %258 : vector<16xf32> to vector<16x1xf32>
    %260 = arith.fptosi %259 : vector<16x1xf32> to vector<16x1xi32>
    %c0_109 = arith.constant 0 : index
    %c139 = arith.constant 139 : index
    %261 = vector.load %arg7[%c0_109, %c139] : memref<16x256xf32, #tpu.memory_space<vmem>>, vector<16x1xf32>
    tpu.vector_store %arg7[%c0_109, %c139], %253 {strides = array<i32>} : memref<16x256xf32, #tpu.memory_space<vmem>>, vector<16x1xf32>,
    %c0_110 = arith.constant 0 : index
    %c139_111 = arith.constant 139 : index
    %262 = vector.load %arg8[%c0_110, %c139_111] : memref<16x256xi32, #tpu.memory_space<vmem>>, vector<16x1xi32>
    tpu.vector_store %arg8[%c0_110, %c139_111], %260 {strides = array<i32>} : memref<16x256xi32, #tpu.memory_space<vmem>>, vector<16x1xi32>,
    %c0_112 = arith.constant 0 : index
    %c11 = arith.constant 11 : index
    %263 = vector.load %arg6[%c0_112, %c11] : memref<16x16xi32, #tpu.memory_space<vmem>>, vector<16x1xi32>
    tpu.vector_store %arg6[%c0_112, %c11], %260 {strides = array<i32>} : memref<16x16xi32, #tpu.memory_space<vmem>>, vector<16x1xi32>,
    %264 = vector.broadcast %253 : vector<16x1xf32> to vector<16x256xf32>
    %265 = arith.cmpf oeq, %251, %264 : vector<16x256xf32>
    %266 = vector.broadcast %260 : vector<16x1xi32> to vector<16x256xi32>
    %267 = arith.cmpi eq, %41, %266 : vector<16x256xi32>
    %268 = arith.andi %265, %267 : vector<16x256xi1>
    %cst_113 = arith.constant 0x7F800000 : f32
    %269 = vector.broadcast %cst_113 : f32 to vector<16x256xf32>
    %270 = arith.select %268, %269, %251 : vector<16x256xi1>, vector<16x256xf32>
    %cst_114 = arith.constant dense<0x7F800000> : vector<16xf32>
    %271 = vector.multi_reduction <minimumf>, %270, %cst_114 [1] : vector<16x256xf32> to vector<16xf32>
    %272 = vector.shape_cast %271 : vector<16xf32> to vector<16x1xf32>
    %273 = vector.broadcast %272 : vector<16x1xf32> to vector<16x256xf32>
    %274 = arith.cmpf oeq, %270, %273 : vector<16x256xf32>
    %cst_115 = arith.constant 3.000000e+38 : f32
    %275 = vector.broadcast %cst_115 : f32 to vector<16x256xf32>
    %276 = arith.select %274, %42, %275 : vector<16x256xi1>, vector<16x256xf32>
    %cst_116 = arith.constant dense<0x7F800000> : vector<16xf32>
    %277 = vector.multi_reduction <minimumf>, %276, %cst_116 [1] : vector<16x256xf32> to vector<16xf32>
    %278 = vector.shape_cast %277 : vector<16xf32> to vector<16x1xf32>
    %279 = arith.fptosi %278 : vector<16x1xf32> to vector<16x1xi32>
    %c0_117 = arith.constant 0 : index
    %c140 = arith.constant 140 : index
    %280 = vector.load %arg7[%c0_117, %c140] : memref<16x256xf32, #tpu.memory_space<vmem>>, vector<16x1xf32>
    tpu.vector_store %arg7[%c0_117, %c140], %272 {strides = array<i32>} : memref<16x256xf32, #tpu.memory_space<vmem>>, vector<16x1xf32>,
    %c0_118 = arith.constant 0 : index
    %c140_119 = arith.constant 140 : index
    %281 = vector.load %arg8[%c0_118, %c140_119] : memref<16x256xi32, #tpu.memory_space<vmem>>, vector<16x1xi32>
    tpu.vector_store %arg8[%c0_118, %c140_119], %279 {strides = array<i32>} : memref<16x256xi32, #tpu.memory_space<vmem>>, vector<16x1xi32>,
    %c0_120 = arith.constant 0 : index
    %c12 = arith.constant 12 : index
    %282 = vector.load %arg6[%c0_120, %c12] : memref<16x16xi32, #tpu.memory_space<vmem>>, vector<16x1xi32>
    tpu.vector_store %arg6[%c0_120, %c12], %279 {strides = array<i32>} : memref<16x16xi32, #tpu.memory_space<vmem>>, vector<16x1xi32>,
    %283 = vector.broadcast %272 : vector<16x1xf32> to vector<16x256xf32>
    %284 = arith.cmpf oeq, %270, %283 : vector<16x256xf32>
    %285 = vector.broadcast %279 : vector<16x1xi32> to vector<16x256xi32>
    %286 = arith.cmpi eq, %41, %285 : vector<16x256xi32>
    %287 = arith.andi %284, %286 : vector<16x256xi1>
    %cst_121 = arith.constant 0x7F800000 : f32
    %288 = vector.broadcast %cst_121 : f32 to vector<16x256xf32>
    %289 = arith.select %287, %288, %270 : vector<16x256xi1>, vector<16x256xf32>
    %cst_122 = arith.constant dense<0x7F800000> : vector<16xf32>
    %290 = vector.multi_reduction <minimumf>, %289, %cst_122 [1] : vector<16x256xf32> to vector<16xf32>
    %291 = vector.shape_cast %290 : vector<16xf32> to vector<16x1xf32>
    %292 = vector.broadcast %291 : vector<16x1xf32> to vector<16x256xf32>
    %293 = arith.cmpf oeq, %289, %292 : vector<16x256xf32>
    %cst_123 = arith.constant 3.000000e+38 : f32
    %294 = vector.broadcast %cst_123 : f32 to vector<16x256xf32>
    %295 = arith.select %293, %42, %294 : vector<16x256xi1>, vector<16x256xf32>
    %cst_124 = arith.constant dense<0x7F800000> : vector<16xf32>
    %296 = vector.multi_reduction <minimumf>, %295, %cst_124 [1] : vector<16x256xf32> to vector<16xf32>
    %297 = vector.shape_cast %296 : vector<16xf32> to vector<16x1xf32>
    %298 = arith.fptosi %297 : vector<16x1xf32> to vector<16x1xi32>
    %c0_125 = arith.constant 0 : index
    %c141 = arith.constant 141 : index
    %299 = vector.load %arg7[%c0_125, %c141] : memref<16x256xf32, #tpu.memory_space<vmem>>, vector<16x1xf32>
    tpu.vector_store %arg7[%c0_125, %c141], %291 {strides = array<i32>} : memref<16x256xf32, #tpu.memory_space<vmem>>, vector<16x1xf32>,
    %c0_126 = arith.constant 0 : index
    %c141_127 = arith.constant 141 : index
    %300 = vector.load %arg8[%c0_126, %c141_127] : memref<16x256xi32, #tpu.memory_space<vmem>>, vector<16x1xi32>
    tpu.vector_store %arg8[%c0_126, %c141_127], %298 {strides = array<i32>} : memref<16x256xi32, #tpu.memory_space<vmem>>, vector<16x1xi32>,
    %c0_128 = arith.constant 0 : index
    %c13 = arith.constant 13 : index
    %301 = vector.load %arg6[%c0_128, %c13] : memref<16x16xi32, #tpu.memory_space<vmem>>, vector<16x1xi32>
    tpu.vector_store %arg6[%c0_128, %c13], %298 {strides = array<i32>} : memref<16x16xi32, #tpu.memory_space<vmem>>, vector<16x1xi32>,
    %302 = vector.broadcast %291 : vector<16x1xf32> to vector<16x256xf32>
    %303 = arith.cmpf oeq, %289, %302 : vector<16x256xf32>
    %304 = vector.broadcast %298 : vector<16x1xi32> to vector<16x256xi32>
    %305 = arith.cmpi eq, %41, %304 : vector<16x256xi32>
    %306 = arith.andi %303, %305 : vector<16x256xi1>
    %cst_129 = arith.constant 0x7F800000 : f32
    %307 = vector.broadcast %cst_129 : f32 to vector<16x256xf32>
    %308 = arith.select %306, %307, %289 : vector<16x256xi1>, vector<16x256xf32>
    %cst_130 = arith.constant dense<0x7F800000> : vector<16xf32>
    %309 = vector.multi_reduction <minimumf>, %308, %cst_130 [1] : vector<16x256xf32> to vector<16xf32>
    %310 = vector.shape_cast %309 : vector<16xf32> to vector<16x1xf32>
    %311 = vector.broadcast %310 : vector<16x1xf32> to vector<16x256xf32>
    %312 = arith.cmpf oeq, %308, %311 : vector<16x256xf32>
    %cst_131 = arith.constant 3.000000e+38 : f32
    %313 = vector.broadcast %cst_131 : f32 to vector<16x256xf32>
    %314 = arith.select %312, %42, %313 : vector<16x256xi1>, vector<16x256xf32>
    %cst_132 = arith.constant dense<0x7F800000> : vector<16xf32>
    %315 = vector.multi_reduction <minimumf>, %314, %cst_132 [1] : vector<16x256xf32> to vector<16xf32>
    %316 = vector.shape_cast %315 : vector<16xf32> to vector<16x1xf32>
    %317 = arith.fptosi %316 : vector<16x1xf32> to vector<16x1xi32>
    %c0_133 = arith.constant 0 : index
    %c142 = arith.constant 142 : index
    %318 = vector.load %arg7[%c0_133, %c142] : memref<16x256xf32, #tpu.memory_space<vmem>>, vector<16x1xf32>
    tpu.vector_store %arg7[%c0_133, %c142], %310 {strides = array<i32>} : memref<16x256xf32, #tpu.memory_space<vmem>>, vector<16x1xf32>,
    %c0_134 = arith.constant 0 : index
    %c142_135 = arith.constant 142 : index
    %319 = vector.load %arg8[%c0_134, %c142_135] : memref<16x256xi32, #tpu.memory_space<vmem>>, vector<16x1xi32>
    tpu.vector_store %arg8[%c0_134, %c142_135], %317 {strides = array<i32>} : memref<16x256xi32, #tpu.memory_space<vmem>>, vector<16x1xi32>,
    %c0_136 = arith.constant 0 : index
    %c14 = arith.constant 14 : index
    %320 = vector.load %arg6[%c0_136, %c14] : memref<16x16xi32, #tpu.memory_space<vmem>>, vector<16x1xi32>
    tpu.vector_store %arg6[%c0_136, %c14], %317 {strides = array<i32>} : memref<16x16xi32, #tpu.memory_space<vmem>>, vector<16x1xi32>,
    %321 = vector.broadcast %310 : vector<16x1xf32> to vector<16x256xf32>
    %322 = arith.cmpf oeq, %308, %321 : vector<16x256xf32>
    %323 = vector.broadcast %317 : vector<16x1xi32> to vector<16x256xi32>
    %324 = arith.cmpi eq, %41, %323 : vector<16x256xi32>
    %325 = arith.andi %322, %324 : vector<16x256xi1>
    %cst_137 = arith.constant 0x7F800000 : f32
    %326 = vector.broadcast %cst_137 : f32 to vector<16x256xf32>
    %327 = arith.select %325, %326, %308 : vector<16x256xi1>, vector<16x256xf32>
    %cst_138 = arith.constant dense<0x7F800000> : vector<16xf32>
    %328 = vector.multi_reduction <minimumf>, %327, %cst_138 [1] : vector<16x256xf32> to vector<16xf32>
    %329 = vector.shape_cast %328 : vector<16xf32> to vector<16x1xf32>
    %330 = vector.broadcast %329 : vector<16x1xf32> to vector<16x256xf32>
    %331 = arith.cmpf oeq, %327, %330 : vector<16x256xf32>
    %cst_139 = arith.constant 3.000000e+38 : f32
    %332 = vector.broadcast %cst_139 : f32 to vector<16x256xf32>
    %333 = arith.select %331, %42, %332 : vector<16x256xi1>, vector<16x256xf32>
    %cst_140 = arith.constant dense<0x7F800000> : vector<16xf32>
    %334 = vector.multi_reduction <minimumf>, %333, %cst_140 [1] : vector<16x256xf32> to vector<16xf32>
    %335 = vector.shape_cast %334 : vector<16xf32> to vector<16x1xf32>
    %336 = arith.fptosi %335 : vector<16x1xf32> to vector<16x1xi32>
    %c0_141 = arith.constant 0 : index
    %c143 = arith.constant 143 : index
    %337 = vector.load %arg7[%c0_141, %c143] : memref<16x256xf32, #tpu.memory_space<vmem>>, vector<16x1xf32>
    tpu.vector_store %arg7[%c0_141, %c143], %329 {strides = array<i32>} : memref<16x256xf32, #tpu.memory_space<vmem>>, vector<16x1xf32>,
    %c0_142 = arith.constant 0 : index
    %c143_143 = arith.constant 143 : index
    %338 = vector.load %arg8[%c0_142, %c143_143] : memref<16x256xi32, #tpu.memory_space<vmem>>, vector<16x1xi32>
    tpu.vector_store %arg8[%c0_142, %c143_143], %336 {strides = array<i32>} : memref<16x256xi32, #tpu.memory_space<vmem>>, vector<16x1xi32>,
    %c0_144 = arith.constant 0 : index
    %c15 = arith.constant 15 : index
    %339 = vector.load %arg6[%c0_144, %c15] : memref<16x16xi32, #tpu.memory_space<vmem>>, vector<16x1xi32>
    tpu.vector_store %arg6[%c0_144, %c15], %336 {strides = array<i32>} : memref<16x16xi32, #tpu.memory_space<vmem>>, vector<16x1xi32>,
    return
  }
  func.func @transform_0(%arg0: i32, %arg1: i32) -> (i32, i32) {
    %c0_i32 = arith.constant 0 : i32
    %c0_i32_0 = arith.constant 0 : i32
    return %arg0, %c0_i32 : i32, i32
  }
  func.func @transform_1(%arg0: i32, %arg1: i32) -> (i32, i32) {
    %c0_i32 = arith.constant 0 : i32
    %c0_i32_0 = arith.constant 0 : i32
    return %c0_i32, %arg1 : i32, i32
  }
  func.func @transform_2(%arg0: i32, %arg1: i32) -> (i32, i32) {
    %c0_i32 = arith.constant 0 : i32
    %c0_i32_0 = arith.constant 0 : i32
    return %arg0, %c0_i32 : i32, i32
  }
  func.func @transform_3(%arg0: i32, %arg1: i32) -> (i32, i32) {
    %c0_i32 = arith.constant 0 : i32
    %c0_i32_0 = arith.constant 0 : i32
    return %c0_i32, %arg1 : i32, i32
  }
  func.func @transform_4(%arg0: i32, %arg1: i32) -> (i32, i32) {
    %c0_i32 = arith.constant 0 : i32
    %c0_i32_0 = arith.constant 0 : i32
    return %arg0, %c0_i32 : i32, i32
  }
}

</mosaic_0001>

<llo_original>
// kernel: tpu_custom_call.1
$region0: #{tpu_custom_call.1}
  #allocation0 [shape = 'u32[]', space=smem, size = 0x4, offset = 0x4, fixed_abs, tag = 'smem constant byte address 0x4 - core index']
  #allocation1 [shape = 'u32[72,128]{1,0:T(1,128)}', space=vmem, size = 0x9000, scoped, tag = 'internal scratch']
  #allocation2 [shape = 'f32[16,256]{1,0:T(8,128)}', space=vmem, size = 0x4000, scoped, tag = 'scratch operand']
  #allocation3 [shape = 's32[16,256]{1,0:T(8,128)}', space=vmem, size = 0x4000, scoped, tag = 'scratch operand']
  %s0 = inlined_call_operand.vmem [shape: f32[16,3], index: 0, kind: input, shape index: {}]
  %s1 = inlined_call_operand.vmem [shape: f32[3,128], index: 1, kind: input, shape index: {}]
  %s2 = inlined_call_operand.vmem [shape: s32[16,1], index: 2, kind: input, shape index: {}]
  %s3 = inlined_call_operand.vmem [shape: s32[1,128], index: 3, kind: input, shape index: {}]
  %s4 = inlined_call_operand.hbm [shape: s32[16,16], index: 4, kind: output, shape index: {}]
  %s5 = sld [smem:[#allocation0]]
  $region30: #{tpu_custom_call.1} parent=0
    _
  %s7 = ssub.s32 1, %s5
  %s8 = scalar_select 0, %s7, %s5
  $region1: #{tpu_custom_call.1} parent=0
    #allocation4 [shape = 'u8[8192]{0}', space=vmem, size = 0x2000, scoped, tag = 'output window, operand 0, single buffered']
    #allocation5 [shape = 's32[1]{0}', space=sflag, size = 0x4, scoped, tag = 'scoped memory for tpu_custom_call.1']
    %9 = vsyncpa [#allocation5], 0
    // Predicated region
    $region2: #{tpu_custom_call.1} parent=1 // pred_check
      _
    $region3: #{tpu_custom_call.1} parent=1 // pred_check_branch
      %11 = sbr.rel (0) target = $region5
    $region4: #{tpu_custom_call.1} parent=1 // pred_region
      _
    $region5: #{tpu_custom_call.1} parent=1 // pred_fallthru
      _
    // Predicated region
    $region6: #{tpu_custom_call.1} parent=1 // pred_check
      _
    $region7: #{tpu_custom_call.1} parent=1 // pred_check_branch
      %13 = sbr.rel (0) target = $region9
    $region8: #{tpu_custom_call.1} parent=1 // pred_region
      _
    $region9: #{tpu_custom_call.1} parent=1 // pred_fallthru
      _
    // Predicated region
    $region10: #{tpu_custom_call.1} parent=1 // pred_check
      _
    $region11: #{tpu_custom_call.1} parent=1 // pred_check_branch
      %15 = sbr.rel (0) target = $region13
    $region12: #{tpu_custom_call.1} parent=1 // pred_region
      _
    $region13: #{tpu_custom_call.1} parent=1 // pred_fallthru
      _
    // Predicated region
    $region14: #{tpu_custom_call.1} parent=1 // pred_check
      _
    $region15: #{tpu_custom_call.1} parent=1 // pred_check_branch
      %17 = sbr.rel (0) target = $region17
    $region16: #{tpu_custom_call.1} parent=1 // pred_region
      _
    $region17: #{tpu_custom_call.1} parent=1 // pred_fallthru
      _
    %p18 = scmp.eq.s32.totalorder 0, 0
    // Predicated region
    $region18: #{tpu_custom_call.1} parent=1 // pred_check
      %p19 = pneg %p18
    $region19: #{tpu_custom_call.1} parent=1 // pred_check_branch
      %21 = sbr.rel (%p19) target = $region21
    $region20: #{tpu_custom_call.1} parent=1 // pred_region
      %22 = vst [vmem:[#allocation2] sm:$0xff] 1e+30
      %23 = vst [vmem:[#allocation2 + $0x8] sm:$0xff] 1e+30
      %24 = vst [vmem:[#allocation2 + $0x10] sm:$0xff] 1e+30
      %25 = vst [vmem:[#allocation2 + $0x18] sm:$0xff] 1e+30
      %26 = vst [vmem:[#allocation3] sm:$0xff] 0
      %27 = vst [vmem:[#allocation3 + $0x8] sm:$0xff] 0
      %28 = vst [vmem:[#allocation3 + $0x10] sm:$0xff] 0
      %29 = vst [vmem:[#allocation3 + $0x18] sm:$0xff] 0
    $region21: #{tpu_custom_call.1} parent=1 // pred_fallthru
      _
    %v30 = vld [vmem:[%s0] sm:$0xff]
    %v31 = vld [vmem:[%s0 + $0x8] sm:$0xff]
    %v32 = vld [vmem:[%s1] sm:$0x7]
    %34 = vset.pattern.permute.xlu0 0
    %35 = vperm.xlu0 %34, %v30
    %v36 = vpop.permute.xlu0 %35
    %39 = vset.pattern.permute.xlu0 0
    %40 = vperm.xlu0 %39, %v31
    %v41 = vpop.permute.xlu0 %40
    %v43 = vperm.slane %v32, 0
    %v44 = vsub.f32 %v36, %v43
    %v45 = vsub.f32 %v41, %v43
    %v46 = vmul.f32 %v44, %v44
    %v47 = vmul.f32 %v45, %v45
    %v48 = vadd.f32 %v46, 0.0
    %v49 = vadd.f32 %v47, 0.0
    %50 = vset.pattern.permute.xlu0 1
    %51 = vperm.xlu0 %50, %v30
    %v52 = vpop.permute.xlu0 %51
    %54 = vset.pattern.permute.xlu0 1
    %55 = vperm.xlu0 %54, %v31
    %v56 = vpop.permute.xlu0 %55
    %v58 = vperm.slane %v32, 1
    %v59 = vsub.f32 %v52, %v58
    %v60 = vsub.f32 %v56, %v58
    %v61 = vmul.f32 %v59, %v59
    %v62 = vmul.f32 %v60, %v60
    %v63 = vadd.f32 %v48, %v61
    %v64 = vadd.f32 %v49, %v62
    %65 = vset.pattern.permute.xlu0 2
    %66 = vperm.xlu0 %65, %v30
    %v67 = vpop.permute.xlu0 %66
    %69 = vset.pattern.permute.xlu0 2
    %70 = vperm.xlu0 %69, %v31
    %v71 = vpop.permute.xlu0 %70
    %v73 = vperm.slane %v32, 2
    %v74 = vsub.f32 %v67, %v73
    %v75 = vsub.f32 %v71, %v73
    %v76 = vmul.f32 %v74, %v74
    %v77 = vmul.f32 %v75, %v75
    %v78 = vadd.f32 %v63, %v76
    %v79 = vadd.f32 %v64, %v77
    %v80 = vld [vmem:[%s2] sm:$0xff]
    %v81 = vld [vmem:[%s2 + $0x8] sm:$0xff]
    %v82 = vld [vmem:[%s3] sm:$0x1]
    %83 = vset.pattern.permute.xlu0 0
    %84 = vperm.xlu0 %83, %v80
    %v85 = vpop.permute.xlu0 %84
    %86 = vset.pattern.permute.xlu0 0
    %87 = vperm.xlu0 %86, %v81
    %v88 = vpop.permute.xlu0 %87
    %v89 = vperm.slane %v82, 0
    %vm90 = vcmp.eq.s32.totalorder %v85, %v89
    %vm91 = vcmp.eq.s32.totalorder %v88, %v89
    %v92 = vsel %vm90, %v78, 1e+30
    %v93 = vsel %vm91, %v79, 1e+30
    %v94 = vlaneseq
    %v95 = vand.u32 %v94, 127
    %s96 = smul.u32 0, 128
    %v97 = vstv %s96
    %v98 = vadd.s32 %v95, %v97
    %99 = vst [vmem:[#allocation2] sm:$0xff] %v92
    %100 = vst [vmem:[#allocation2 + $0x10] sm:$0xff] %v93
    %101 = vst [vmem:[#allocation3] sm:$0xff] %v98
    %102 = vst [vmem:[#allocation3 + $0x10] sm:$0xff] %v98
    %v103 = vld [vmem:[#allocation2] sm:$0xff]
    %v104 = vld [vmem:[#allocation2 + $0x8] sm:$0xff]
    %v105 = vld [vmem:[#allocation2 + $0x10] sm:$0xff]
    %v106 = vld [vmem:[#allocation2 + $0x18] sm:$0xff]
    %v107 = vld [vmem:[#allocation3] sm:$0xff]
    %v108 = vld [vmem:[#allocation3 + $0x8] sm:$0xff]
    %v109 = vld [vmem:[#allocation3 + $0x10] sm:$0xff]
    %v110 = vld [vmem:[#allocation3 + $0x18] sm:$0xff]
    %v111 = vcvt.s32.f32 %v107
    %v112 = vcvt.s32.f32 %v108
    %v113 = vcvt.s32.f32 %v109
    %v114 = vcvt.s32.f32 %v110
    %v115 = vmin.f32 %v103, %v104
    %116 = vmin.xlane.f32.xlu0 %v115
    %v117 = vpop.xlane.xlu0 %116
    %v118 = vmin.f32 %v105, %v106
    %119 = vmin.xlane.f32.xlu0 %v118
    %v120 = vpop.xlane.xlu0 %119
    %vm121 = vcmp.eq.f32.partialorder %v103, %v117
    %vm122 = vcmp.eq.f32.partialorder %v104, %v117
    %vm123 = vcmp.eq.f32.partialorder %v105, %v120
    %vm124 = vcmp.eq.f32.partialorder %v106, %v120
    %v125 = vsel %vm121, %v111, 3e+38
    %v126 = vsel %vm122, %v112, 3e+38
    %v127 = vsel %vm123, %v113, 3e+38
    %v128 = vsel %vm124, %v114, 3e+38
    %v129 = vmin.f32 %v125, %v126
    %130 = vmin.xlane.f32.xlu0 %v129
    %v131 = vpop.xlane.xlu0 %130
    %v132 = vmin.f32 %v127, %v128
    %133 = vmin.xlane.f32.xlu0 %v132
    %v134 = vpop.xlane.xlu0 %133
    %v135 = vcvt.f32.s32.to.zero.pseudo %v131
    %v136 = vcvt.f32.s32.to.zero.pseudo %v134
    %vm137 = vcmask 7168
    %138 = vst.msk [vmem:[#allocation2 + $0x8] sm:$0xff] %vm137, %v117
    %139 = vst.msk [vmem:[#allocation2 + $0x18] sm:$0xff] %vm137, %v120
    %140 = vst.msk [vmem:[#allocation3 + $0x8] sm:$0xff] %vm137, %v135
    %141 = vst.msk [vmem:[#allocation3 + $0x18] sm:$0xff] %vm137, %v136
    %142 = vst.msk [vmem:[#allocation4] sm:$0xff] %vm137, %v135
    %143 = vst.msk [vmem:[#allocation4 + $0x8] sm:$0xff] %vm137, %v136
    %vm144 = vcmp.eq.s32.totalorder %v107, %v135
    %vm145 = vcmp.eq.s32.totalorder %v108, %v135
    %vm146 = vcmp.eq.s32.totalorder %v109, %v136
    %vm147 = vcmp.eq.s32.totalorder %v110, %v136
    %vm148 = vmand %vm121, %vm144
    %vm149 = vmand %vm122, %vm145
    %vm150 = vmand %vm123, %vm146
    %vm151 = vmand %vm124, %vm147
    %v152 = vsel %vm148, inf, %v103
    %v153 = vsel %vm149, inf, %v104
    %v154 = vsel %vm150, inf, %v105
    %v155 = vsel %vm151, inf, %v106
    %v156 = vmin.f32 %v152, %v153
    %157 = vmin.xlane.f32.xlu0 %v156
    %v158 = vpop.xlane.xlu0 %157
    %v159 = vmin.f32 %v154, %v155
    %160 = vmin.xlane.f32.xlu0 %v159
    %v161 = vpop.xlane.xlu0 %160
    %vm162 = vcmp.eq.f32.partialorder %v152, %v158
    %vm163 = vcmp.eq.f32.partialorder %v153, %v158
    %vm164 = vcmp.eq.f32.partialorder %v154, %v161
    %vm165 = vcmp.eq.f32.partialorder %v155, %v161
    %v166 = vsel %vm162, %v111, 3e+38
    %v167 = vsel %vm163, %v112, 3e+38
    %v168 = vsel %vm164, %v113, 3e+38
    %v169 = vsel %vm165, %v114, 3e+38
    %v170 = vmin.f32 %v166, %v167
    %171 = vmin.xlane.f32.xlu0 %v170
    %v172 = vpop.xlane.xlu0 %171
    %v173 = vmin.f32 %v168, %v169
    %174 = vmin.xlane.f32.xlu0 %v173
    %v175 = vpop.xlane.xlu0 %174
    %v176 = vcvt.f32.s32.to.zero.pseudo %v172
    %v177 = vcvt.f32.s32.to.zero.pseudo %v175
    %vm178 = vcmask 15368
    %179 = vst.msk [vmem:[#allocation2 + $0x8] sm:$0xff] %vm178, %v158
    %180 = vst.msk [vmem:[#allocation2 + $0x18] sm:$0xff] %vm178, %v161
    %181 = vst.msk [vmem:[#allocation3 + $0x8] sm:$0xff] %vm178, %v176
    %182 = vst.msk [vmem:[#allocation3 + $0x18] sm:$0xff] %vm178, %v177
    %183 = vst.msk [vmem:[#allocation4] sm:$0xff] %vm178, %v176
    %184 = vst.msk [vmem:[#allocation4 + $0x8] sm:$0xff] %vm178, %v177
    %vm185 = vcmp.eq.s32.totalorder %v107, %v176
    %vm186 = vcmp.eq.s32.totalorder %v108, %v176
    %vm187 = vcmp.eq.s32.totalorder %v109, %v177
    %vm188 = vcmp.eq.s32.totalorder %v110, %v177
    %vm189 = vmand %vm162, %vm185
    %vm190 = vmand %vm163, %vm186
    %vm191 = vmand %vm164, %vm187
    %vm192 = vmand %vm165, %vm188
    %v193 = vsel %vm189, inf, %v152
    %v194 = vsel %vm190, inf, %v153
    %v195 = vsel %vm191, inf, %v154
    %v196 = vsel %vm192, inf, %v155
    %v197 = vmin.f32 %v193, %v194
    %198 = vmin.xlane.f32.xlu0 %v197
    %v199 = vpop.xlane.xlu0 %198
    %v200 = vmin.f32 %v195, %v196
    %201 = vmin.xlane.f32.xlu0 %v200
    %v202 = vpop.xlane.xlu0 %201
    %vm203 = vcmp.eq.f32.partialorder %v193, %v199
    %vm204 = vcmp.eq.f32.partialorder %v194, %v199
    %vm205 = vcmp.eq.f32.partialorder %v195, %v202
    %vm206 = vcmp.eq.f32.partialorder %v196, %v202
    %v207 = vsel %vm203, %v111, 3e+38
    %v208 = vsel %vm204, %v112, 3e+38
    %v209 = vsel %vm205, %v113, 3e+38
    %v210 = vsel %vm206, %v114, 3e+38
    %v211 = vmin.f32 %v207, %v208
    %212 = vmin.xlane.f32.xlu0 %v211
    %v213 = vpop.xlane.xlu0 %212
    %v214 = vmin.f32 %v209, %v210
    %215 = vmin.xlane.f32.xlu0 %v214
    %v216 = vpop.xlane.xlu0 %215
    %v217 = vcvt.f32.s32.to.zero.pseudo %v213
    %v218 = vcvt.f32.s32.to.zero.pseudo %v216
    %vm219 = vcmask 23568
    %220 = vst.msk [vmem:[#allocation2 + $0x8] sm:$0xff] %vm219, %v199
    %221 = vst.msk [vmem:[#allocation2 + $0x18] sm:$0xff] %vm219, %v202
    %222 = vst.msk [vmem:[#allocation3 + $0x8] sm:$0xff] %vm219, %v217
    %223 = vst.msk [vmem:[#allocation3 + $0x18] sm:$0xff] %vm219, %v218
    %224 = vst.msk [vmem:[#allocation4] sm:$0xff] %vm219, %v217
    %225 = vst.msk [vmem:[#allocation4 + $0x8] sm:$0xff] %vm219, %v218
    %vm226 = vcmp.eq.s32.totalorder %v107, %v217
    %vm227 = vcmp.eq.s32.totalorder %v108, %v217
    %vm228 = vcmp.eq.s32.totalorder %v109, %v218
    %vm229 = vcmp.eq.s32.totalorder %v110, %v218
    %vm230 = vmand %vm203, %vm226
    %vm231 = vmand %vm204, %vm227
    %vm232 = vmand %vm205, %vm228
    %vm233 = vmand %vm206, %vm229
    %v234 = vsel %vm230, inf, %v193
    %v235 = vsel %vm231, inf, %v194
    %v236 = vsel %vm232, inf, %v195
    %v237 = vsel %vm233, inf, %v196
    %v238 = vmin.f32 %v234, %v235
    %239 = vmin.xlane.f32.xlu0 %v238
    %v240 = vpop.xlane.xlu0 %239
    %v241 = vmin.f32 %v236, %v237
    %242 = vmin.xlane.f32.xlu0 %v241
    %v243 = vpop.xlane.xlu0 %242
    %vm244 = vcmp.eq.f32.partialorder %v234, %v240
    %vm245 = vcmp.eq.f32.partialorder %v235, %v240
    %vm246 = vcmp.eq.f32.partialorder %v236, %v243
    %vm247 = vcmp.eq.f32.partialorder %v237, %v243
    %v248 = vsel %vm244, %v111, 3e+38
    %v249 = vsel %vm245, %v112, 3e+38
    %v250 = vsel %vm246, %v113, 3e+38
    %v251 = vsel %vm247, %v114, 3e+38
    %v252 = vmin.f32 %v248, %v249
    %253 = vmin.xlane.f32.xlu0 %v252
    %v254 = vpop.xlane.xlu0 %253
    %v255 = vmin.f32 %v250, %v251
    %256 = vmin.xlane.f32.xlu0 %v255
    %v257 = vpop.xlane.xlu0 %256
    %v258 = vcvt.f32.s32.to.zero.pseudo %v254
    %v259 = vcvt.f32.s32.to.zero.pseudo %v257
    %vm260 = vcmask 31768
    %261 = vst.msk [vmem:[#allocation2 + $0x8] sm:$0xff] %vm260, %v240
    %262 = vst.msk [vmem:[#allocation2 + $0x18] sm:$0xff] %vm260, %v243
    %263 = vst.msk [vmem:[#allocation3 + $0x8] sm:$0xff] %vm260, %v258
    %264 = vst.msk [vmem:[#allocation3 + $0x18] sm:$0xff] %vm260, %v259
    %265 = vst.msk [vmem:[#allocation4] sm:$0xff] %vm260, %v258
    %266 = vst.msk [vmem:[#allocation4 + $0x8] sm:$0xff] %vm260, %v259
    %vm267 = vcmp.eq.s32.totalorder %v107, %v258
    %vm268 = vcmp.eq.s32.totalorder %v108, %v258
    %vm269 = vcmp.eq.s32.totalorder %v109, %v259
    %vm270 = vcmp.eq.s32.totalorder %v110, %v259
    %vm271 = vmand %vm244, %vm267
    %vm272 = vmand %vm245, %vm268
    %vm273 = vmand %vm246, %vm269
    %vm274 = vmand %vm247, %vm270
    %v275 = vsel %vm271, inf, %v234
    %v276 = vsel %vm272, inf, %v235
    %v277 = vsel %vm273, inf, %v236
    %v278 = vsel %vm274, inf, %v237
    %v279 = vmin.f32 %v275, %v276
    %280 = vmin.xlane.f32.xlu0 %v279
    %v281 = vpop.xlane.xlu0 %280
    %v282 = vmin.f32 %v277, %v278
    %283 = vmin.xlane.f32.xlu0 %v282
    %v284 = vpop.xlane.xlu0 %283
    %vm285 = vcmp.eq.f32.partialorder %v275, %v281
    %vm286 = vcmp.eq.f32.partialorder %v276, %v281
    %vm287 = vcmp.eq.f32.partialorder %v277, %v284
    %vm288 = vcmp.eq.f32.partialorder %v278, %v284
    %v289 = vsel %vm285, %v111, 3e+38
    %v290 = vsel %vm286, %v112, 3e+38
    %v291 = vsel %vm287, %v113, 3e+38
    %v292 = vsel %vm288, %v114, 3e+38
    %v293 = vmin.f32 %v289, %v290
    %294 = vmin.xlane.f32.xlu0 %v293
    %v295 = vpop.xlane.xlu0 %294
    %v296 = vmin.f32 %v291, %v292
    %297 = vmin.xlane.f32.xlu0 %v296
    %v298 = vpop.xlane.xlu0 %297
    %v299 = vcvt.f32.s32.to.zero.pseudo %v295
    %v300 = vcvt.f32.s32.to.zero.pseudo %v298
    %vm301 = vcmask 39968
    %302 = vst.msk [vmem:[#allocation2 + $0x8] sm:$0xff] %vm301, %v281
    %303 = vst.msk [vmem:[#allocation2 + $0x18] sm:$0xff] %vm301, %v284
    %304 = vst.msk [vmem:[#allocation3 + $0x8] sm:$0xff] %vm301, %v299
    %305 = vst.msk [vmem:[#allocation3 + $0x18] sm:$0xff] %vm301, %v300
    %306 = vst.msk [vmem:[#allocation4] sm:$0xff] %vm301, %v299
    %307 = vst.msk [vmem:[#allocation4 + $0x8] sm:$0xff] %vm301, %v300
    %vm308 = vcmp.eq.s32.totalorder %v107, %v299
    %vm309 = vcmp.eq.s32.totalorder %v108, %v299
    %vm310 = vcmp.eq.s32.totalorder %v109, %v300
    %vm311 = vcmp.eq.s32.totalorder %v110, %v300
    %vm312 = vmand %vm285, %vm308
    %vm313 = vmand %vm286, %vm309
    %vm314 = vmand %vm287, %vm310
    %vm315 = vmand %vm288, %vm311
    %v316 = vsel %vm312, inf, %v275
    %v317 = vsel %vm313, inf, %v276
    %v318 = vsel %vm314, inf, %v277
    %v319 = vsel %vm315, inf, %v278
    %v320 = vmin.f32 %v316, %v317
    %321 = vmin.xlane.f32.xlu0 %v320
    %v322 = vpop.xlane.xlu0 %321
    %v323 = vmin.f32 %v318, %v319
    %324 = vmin.xlane.f32.xlu0 %v323
    %v325 = vpop.xlane.xlu0 %324
    %vm326 = vcmp.eq.f32.partialorder %v316, %v322
    %vm327 = vcmp.eq.f32.partialorder %v317, %v322
    %vm328 = vcmp.eq.f32.partialorder %v318, %v325
    %vm329 = vcmp.eq.f32.partialorder %v319, %v325
    %v330 = vsel %vm326, %v111, 3e+38
    %v331 = vsel %vm327, %v112, 3e+38
    %v332 = vsel %vm328, %v113, 3e+38
    %v333 = vsel %vm329, %v114, 3e+38
    %v334 = vmin.f32 %v330, %v331
    %335 = vmin.xlane.f32.xlu0 %v334
    %v336 = vpop.xlane.xlu0 %335
    %v337 = vmin.f32 %v332, %v333
    %338 = vmin.xlane.f32.xlu0 %v337
    %v339 = vpop.xlane.xlu0 %338
    %v340 = vcvt.f32.s32.to.zero.pseudo %v336
    %v341 = vcvt.f32.s32.to.zero.pseudo %v339
    %vm342 = vcmask 48168
    %343 = vst.msk [vmem:[#allocation2 + $0x8] sm:$0xff] %vm342, %v322
    %344 = vst.msk [vmem:[#allocation2 + $0x18] sm:$0xff] %vm342, %v325
    %345 = vst.msk [vmem:[#allocation3 + $0x8] sm:$0xff] %vm342, %v340
    %346 = vst.msk [vmem:[#allocation3 + $0x18] sm:$0xff] %vm342, %v341
    %347 = vst.msk [vmem:[#allocation4] sm:$0xff] %vm342, %v340
    %348 = vst.msk [vmem:[#allocation4 + $0x8] sm:$0xff] %vm342, %v341
    %vm349 = vcmp.eq.s32.totalorder %v107, %v340
    %vm350 = vcmp.eq.s32.totalorder %v108, %v340
    %vm351 = vcmp.eq.s32.totalorder %v109, %v341
    %vm352 = vcmp.eq.s32.totalorder %v110, %v341
    %vm353 = vmand %vm326, %vm349
    %vm354 = vmand %vm327, %vm350
    %vm355 = vmand %vm328, %vm351
    %vm356 = vmand %vm329, %vm352
    %v357 = vsel %vm353, inf, %v316
    %v358 = vsel %vm354, inf, %v317
    %v359 = vsel %vm355, inf, %v318
    %v360 = vsel %vm356, inf, %v319
    %v361 = vmin.f32 %v357, %v358
    %362 = vmin.xlane.f32.xlu0 %v361
    %v363 = vpop.xlane.xlu0 %362
    %v364 = vmin.f32 %v359, %v360
    %365 = vmin.xlane.f32.xlu0 %v364
    %v366 = vpop.xlane.xlu0 %365
    %vm367 = vcmp.eq.f32.partialorder %v357, %v363
    %vm368 = vcmp.eq.f32.partialorder %v358, %v363
    %vm369 = vcmp.eq.f32.partialorder %v359, %v366
    %vm370 = vcmp.eq.f32.partialorder %v360, %v366
    %v371 = vsel %vm367, %v111, 3e+38
    %v372 = vsel %vm368, %v112, 3e+38
    %v373 = vsel %vm369, %v113, 3e+38
    %v374 = vsel %vm370, %v114, 3e+38
    %v375 = vmin.f32 %v371, %v372
    %376 = vmin.xlane.f32.xlu0 %v375
    %v377 = vpop.xlane.xlu0 %376
    %v378 = vmin.f32 %v373, %v374
    %379 = vmin.xlane.f32.xlu0 %v378
    %v380 = vpop.xlane.xlu0 %379
    %v381 = vcvt.f32.s32.to.zero.pseudo %v377
    %v382 = vcvt.f32.s32.to.zero.pseudo %v380
    %vm383 = vcmask 56368
    %384 = vst.msk [vmem:[#allocation2 + $0x8] sm:$0xff] %vm383, %v363
    %385 = vst.msk [vmem:[#allocation2 + $0x18] sm:$0xff] %vm383, %v366
    %386 = vst.msk [vmem:[#allocation3 + $0x8] sm:$0xff] %vm383, %v381
    %387 = vst.msk [vmem:[#allocation3 + $0x18] sm:$0xff] %vm383, %v382
    %388 = vst.msk [vmem:[#allocation4] sm:$0xff] %vm383, %v381
    %389 = vst.msk [vmem:[#allocation4 + $0x8] sm:$0xff] %vm383, %v382
    %vm390 = vcmp.eq.s32.totalorder %v107, %v381
    %vm391 = vcmp.eq.s32.totalorder %v108, %v381
    %vm392 = vcmp.eq.s32.totalorder %v109, %v382
    %vm393 = vcmp.eq.s32.totalorder %v110, %v382
    %vm394 = vmand %vm367, %vm390
    %vm395 = vmand %vm368, %vm391
    %vm396 = vmand %vm369, %vm392
    %vm397 = vmand %vm370, %vm393
    %v398 = vsel %vm394, inf, %v357
    %v399 = vsel %vm395, inf, %v358
    %v400 = vsel %vm396, inf, %v359
    %v401 = vsel %vm397, inf, %v360
    %v402 = vmin.f32 %v398, %v399
    %403 = vmin.xlane.f32.xlu0 %v402
    %v404 = vpop.xlane.xlu0 %403
    %v405 = vmin.f32 %v400, %v401
    %406 = vmin.xlane.f32.xlu0 %v405
    %v407 = vpop.xlane.xlu0 %406
    %vm408 = vcmp.eq.f32.partialorder %v398, %v404
    %vm409 = vcmp.eq.f32.partialorder %v399, %v404
    %vm410 = vcmp.eq.f32.partialorder %v400, %v407
    %vm411 = vcmp.eq.f32.partialorder %v401, %v407
    %v412 = vsel %vm408, %v111, 3e+38
    %v413 = vsel %vm409, %v112, 3e+38
    %v414 = vsel %vm410, %v113, 3e+38
    %v415 = vsel %vm411, %v114, 3e+38
    %v416 = vmin.f32 %v412, %v413
    %417 = vmin.xlane.f32.xlu0 %v416
    %v418 = vpop.xlane.xlu0 %417
    %v419 = vmin.f32 %v414, %v415
    %420 = vmin.xlane.f32.xlu0 %v419
    %v421 = vpop.xlane.xlu0 %420
    %v422 = vcvt.f32.s32.to.zero.pseudo %v418
    %v423 = vcvt.f32.s32.to.zero.pseudo %v421
    %vm424 = vcmask 64568
    %425 = vst.msk [vmem:[#allocation2 + $0x8] sm:$0xff] %vm424, %v404
    %426 = vst.msk [vmem:[#allocation2 + $0x18] sm:$0xff] %vm424, %v407
    %427 = vst.msk [vmem:[#allocation3 + $0x8] sm:$0xff] %vm424, %v422
    %428 = vst.msk [vmem:[#allocation3 + $0x18] sm:$0xff] %vm424, %v423
    %429 = vst.msk [vmem:[#allocation4] sm:$0xff] %vm424, %v422
    %430 = vst.msk [vmem:[#allocation4 + $0x8] sm:$0xff] %vm424, %v423
    %vm431 = vcmp.eq.s32.totalorder %v107, %v422
    %vm432 = vcmp.eq.s32.totalorder %v108, %v422
    %vm433 = vcmp.eq.s32.totalorder %v109, %v423
    %vm434 = vcmp.eq.s32.totalorder %v110, %v423
    %vm435 = vmand %vm408, %vm431
    %vm436 = vmand %vm409, %vm432
    %vm437 = vmand %vm410, %vm433
    %vm438 = vmand %vm411, %vm434
    %v439 = vsel %vm435, inf, %v398
    %v440 = vsel %vm436, inf, %v399
    %v441 = vsel %vm437, inf, %v400
    %v442 = vsel %vm438, inf, %v401
    %v443 = vmin.f32 %v439, %v440
    %444 = vmin.xlane.f32.xlu0 %v443
    %v445 = vpop.xlane.xlu0 %444
    %v446 = vmin.f32 %v441, %v442
    %447 = vmin.xlane.f32.xlu0 %v446
    %v448 = vpop.xlane.xlu0 %447
    %vm449 = vcmp.eq.f32.partialorder %v439, %v445
    %vm450 = vcmp.eq.f32.partialorder %v440, %v445
    %vm451 = vcmp.eq.f32.partialorder %v441, %v448
    %vm452 = vcmp.eq.f32.partialorder %v442, %v448
    %v453 = vsel %vm449, %v111, 3e+38
    %v454 = vsel %vm450, %v112, 3e+38
    %v455 = vsel %vm451, %v113, 3e+38
    %v456 = vsel %vm452, %v114, 3e+38
    %v457 = vmin.f32 %v453, %v454
    %458 = vmin.xlane.f32.xlu0 %v457
    %v459 = vpop.xlane.xlu0 %458
    %v460 = vmin.f32 %v455, %v456
    %461 = vmin.xlane.f32.xlu0 %v460
    %v462 = vpop.xlane.xlu0 %461
    %v463 = vcvt.f32.s32.to.zero.pseudo %v459
    %v464 = vcvt.f32.s32.to.zero.pseudo %v462
    %vm465 = vcmask 72768
    %466 = vst.msk [vmem:[#allocation2 + $0x8] sm:$0xff] %vm465, %v445
    %467 = vst.msk [vmem:[#allocation2 + $0x18] sm:$0xff] %vm465, %v448
    %468 = vst.msk [vmem:[#allocation3 + $0x8] sm:$0xff] %vm465, %v463
    %469 = vst.msk [vmem:[#allocation3 + $0x18] sm:$0xff] %vm465, %v464
    %470 = vst.msk [vmem:[#allocation4] sm:$0xff] %vm465, %v463
    %471 = vst.msk [vmem:[#allocation4 + $0x8] sm:$0xff] %vm465, %v464
    %vm472 = vcmp.eq.s32.totalorder %v107, %v463
    %vm473 = vcmp.eq.s32.totalorder %v108, %v463
    %vm474 = vcmp.eq.s32.totalorder %v109, %v464
    %vm475 = vcmp.eq.s32.totalorder %v110, %v464
    %vm476 = vmand %vm449, %vm472
    %vm477 = vmand %vm450, %vm473
    %vm478 = vmand %vm451, %vm474
    %vm479 = vmand %vm452, %vm475
    %v480 = vsel %vm476, inf, %v439
    %v481 = vsel %vm477, inf, %v440
    %v482 = vsel %vm478, inf, %v441
    %v483 = vsel %vm479, inf, %v442
    %v484 = vmin.f32 %v480, %v481
    %485 = vmin.xlane.f32.xlu0 %v484
    %v486 = vpop.xlane.xlu0 %485
    %v487 = vmin.f32 %v482, %v483
    %488 = vmin.xlane.f32.xlu0 %v487
    %v489 = vpop.xlane.xlu0 %488
    %vm490 = vcmp.eq.f32.partialorder %v480, %v486
    %vm491 = vcmp.eq.f32.partialorder %v481, %v486
    %vm492 = vcmp.eq.f32.partialorder %v482, %v489
    %vm493 = vcmp.eq.f32.partialorder %v483, %v489
    %v494 = vsel %vm490, %v111, 3e+38
    %v495 = vsel %vm491, %v112, 3e+38
    %v496 = vsel %vm492, %v113, 3e+38
    %v497 = vsel %vm493, %v114, 3e+38
    %v498 = vmin.f32 %v494, %v495
    %499 = vmin.xlane.f32.xlu0 %v498
    %v500 = vpop.xlane.xlu0 %499
    %v501 = vmin.f32 %v496, %v497
    %502 = vmin.xlane.f32.xlu0 %v501
    %v503 = vpop.xlane.xlu0 %502
    %v504 = vcvt.f32.s32.to.zero.pseudo %v500
    %v505 = vcvt.f32.s32.to.zero.pseudo %v503
    %vm506 = vcmask 80968
    %507 = vst.msk [vmem:[#allocation2 + $0x8] sm:$0xff] %vm506, %v486
    %508 = vst.msk [vmem:[#allocation2 + $0x18] sm:$0xff] %vm506, %v489
    %509 = vst.msk [vmem:[#allocation3 + $0x8] sm:$0xff] %vm506, %v504
    %510 = vst.msk [vmem:[#allocation3 + $0x18] sm:$0xff] %vm506, %v505
    %511 = vst.msk [vmem:[#allocation4] sm:$0xff] %vm506, %v504
    %512 = vst.msk [vmem:[#allocation4 + $0x8] sm:$0xff] %vm506, %v505
    %vm513 = vcmp.eq.s32.totalorder %v107, %v504
    %vm514 = vcmp.eq.s32.totalorder %v108, %v504
    %vm515 = vcmp.eq.s32.totalorder %v109, %v505
    %vm516 = vcmp.eq.s32.totalorder %v110, %v505
    %vm517 = vmand %vm490, %vm513
    %vm518 = vmand %vm491, %vm514
    %vm519 = vmand %vm492, %vm515
    %vm520 = vmand %vm493, %vm516
    %v521 = vsel %vm517, inf, %v480
    %v522 = vsel %vm518, inf, %v481
    %v523 = vsel %vm519, inf, %v482
    %v524 = vsel %vm520, inf, %v483
    %v525 = vmin.f32 %v521, %v522
    %526 = vmin.xlane.f32.xlu0 %v525
    %v527 = vpop.xlane.xlu0 %526
    %v528 = vmin.f32 %v523, %v524
    %529 = vmin.xlane.f32.xlu0 %v528
    %v530 = vpop.xlane.xlu0 %529
    %vm531 = vcmp.eq.f32.partialorder %v521, %v527
    %vm532 = vcmp.eq.f32.partialorder %v522, %v527
    %vm533 = vcmp.eq.f32.partialorder %v523, %v530
    %vm534 = vcmp.eq.f32.partialorder %v524, %v530
    %v535 = vsel %vm531, %v111, 3e+38
    %v536 = vsel %vm532, %v112, 3e+38
    %v537 = vsel %vm533, %v113, 3e+38
    %v538 = vsel %vm534, %v114, 3e+38
    %v539 = vmin.f32 %v535, %v536
    %540 = vmin.xlane.f32.xlu0 %v539
    %v541 = vpop.xlane.xlu0 %540
    %v542 = vmin.f32 %v537, %v538
    %543 = vmin.xlane.f32.xlu0 %v542
    %v544 = vpop.xlane.xlu0 %543
    %v545 = vcvt.f32.s32.to.zero.pseudo %v541
    %v546 = vcvt.f32.s32.to.zero.pseudo %v544
    %vm547 = vcmask 89168
    %548 = vst.msk [vmem:[#allocation2 + $0x8] sm:$0xff] %vm547, %v527
    %549 = vst.msk [vmem:[#allocation2 + $0x18] sm:$0xff] %vm547, %v530
    %550 = vst.msk [vmem:[#allocation3 + $0x8] sm:$0xff] %vm547, %v545
    %551 = vst.msk [vmem:[#allocation3 + $0x18] sm:$0xff] %vm547, %v546
    %552 = vst.msk [vmem:[#allocation4] sm:$0xff] %vm547, %v545
    %553 = vst.msk [vmem:[#allocation4 + $0x8] sm:$0xff] %vm547, %v546
    %vm554 = vcmp.eq.s32.totalorder %v107, %v545
    %vm555 = vcmp.eq.s32.totalorder %v108, %v545
    %vm556 = vcmp.eq.s32.totalorder %v109, %v546
    %vm557 = vcmp.eq.s32.totalorder %v110, %v546
    %vm558 = vmand %vm531, %vm554
    %vm559 = vmand %vm532, %vm555
    %vm560 = vmand %vm533, %vm556
    %vm561 = vmand %vm534, %vm557
    %v562 = vsel %vm558, inf, %v521
    %v563 = vsel %vm559, inf, %v522
    %v564 = vsel %vm560, inf, %v523
    %v565 = vsel %vm561, inf, %v524
    %v566 = vmin.f32 %v562, %v563
    %567 = vmin.xlane.f32.xlu0 %v566
    %v568 = vpop.xlane.xlu0 %567
    %v569 = vmin.f32 %v564, %v565
    %570 = vmin.xlane.f32.xlu0 %v569
    %v571 = vpop.xlane.xlu0 %570
    %vm572 = vcmp.eq.f32.partialorder %v562, %v568
    %vm573 = vcmp.eq.f32.partialorder %v563, %v568
    %vm574 = vcmp.eq.f32.partialorder %v564, %v571
    %vm575 = vcmp.eq.f32.partialorder %v565, %v571
    %v576 = vsel %vm572, %v111, 3e+38
    %v577 = vsel %vm573, %v112, 3e+38
    %v578 = vsel %vm574, %v113, 3e+38
    %v579 = vsel %vm575, %v114, 3e+38
    %v580 = vmin.f32 %v576, %v577
    %581 = vmin.xlane.f32.xlu0 %v580
    %v582 = vpop.xlane.xlu0 %581
    %v583 = vmin.f32 %v578, %v579
    %584 = vmin.xlane.f32.xlu0 %v583
    %v585 = vpop.xlane.xlu0 %584
    %v586 = vcvt.f32.s32.to.zero.pseudo %v582
    %v587 = vcvt.f32.s32.to.zero.pseudo %v585
    %vm588 = vcmask 97368
    %589 = vst.msk [vmem:[#allocation2 + $0x8] sm:$0xff] %vm588, %v568
    %590 = vst.msk [vmem:[#allocation2 + $0x18] sm:$0xff] %vm588, %v571
    %591 = vst.msk [vmem:[#allocation3 + $0x8] sm:$0xff] %vm588, %v586
    %592 = vst.msk [vmem:[#allocation3 + $0x18] sm:$0xff] %vm588, %v587
    %593 = vst.msk [vmem:[#allocation4] sm:$0xff] %vm588, %v586
    %594 = vst.msk [vmem:[#allocation4 + $0x8] sm:$0xff] %vm588, %v587
    %vm595 = vcmp.eq.s32.totalorder %v107, %v586
    %vm596 = vcmp.eq.s32.totalorder %v108, %v586
    %vm597 = vcmp.eq.s32.totalorder %v109, %v587
    %vm598 = vcmp.eq.s32.totalorder %v110, %v587
    %vm599 = vmand %vm572, %vm595
    %vm600 = vmand %vm573, %vm596
    %vm601 = vmand %vm574, %vm597
    %vm602 = vmand %vm575, %vm598
    %v603 = vsel %vm599, inf, %v562
    %v604 = vsel %vm600, inf, %v563
    %v605 = vsel %vm601, inf, %v564
    %v606 = vsel %vm602, inf, %v565
    %v607 = vmin.f32 %v603, %v604
    %608 = vmin.xlane.f32.xlu0 %v607
    %v609 = vpop.xlane.xlu0 %608
    %v610 = vmin.f32 %v605, %v606
    %611 = vmin.xlane.f32.xlu0 %v610
    %v612 = vpop.xlane.xlu0 %611
    %vm613 = vcmp.eq.f32.partialorder %v603, %v609
    %vm614 = vcmp.eq.f32.partialorder %v604, %v609
    %vm615 = vcmp.eq.f32.partialorder %v605, %v612
    %vm616 = vcmp.eq.f32.partialorder %v606, %v612
    %v617 = vsel %vm613, %v111, 3e+38
    %v618 = vsel %vm614, %v112, 3e+38
    %v619 = vsel %vm615, %v113, 3e+38
    %v620 = vsel %vm616, %v114, 3e+38
    %v621 = vmin.f32 %v617, %v618
    %622 = vmin.xlane.f32.xlu0 %v621
    %v623 = vpop.xlane.xlu0 %622
    %v624 = vmin.f32 %v619, %v620
    %625 = vmin.xlane.f32.xlu0 %v624
    %v626 = vpop.xlane.xlu0 %625
    %v627 = vcvt.f32.s32.to.zero.pseudo %v623
    %v628 = vcvt.f32.s32.to.zero.pseudo %v626
    %vm629 = vcmask 105568
    %630 = vst.msk [vmem:[#allocation2 + $0x8] sm:$0xff] %vm629, %v609
    %631 = vst.msk [vmem:[#allocation2 + $0x18] sm:$0xff] %vm629, %v612
    %632 = vst.msk [vmem:[#allocation3 + $0x8] sm:$0xff] %vm629, %v627
    %633 = vst.msk [vmem:[#allocation3 + $0x18] sm:$0xff] %vm629, %v628
    %634 = vst.msk [vmem:[#allocation4] sm:$0xff] %vm629, %v627
    %635 = vst.msk [vmem:[#allocation4 + $0x8] sm:$0xff] %vm629, %v628
    %vm636 = vcmp.eq.s32.totalorder %v107, %v627
    %vm637 = vcmp.eq.s32.totalorder %v108, %v627
    %vm638 = vcmp.eq.s32.totalorder %v109, %v628
    %vm639 = vcmp.eq.s32.totalorder %v110, %v628
    %vm640 = vmand %vm613, %vm636
    %vm641 = vmand %vm614, %vm637
    %vm642 = vmand %vm615, %vm638
    %vm643 = vmand %vm616, %vm639
    %v644 = vsel %vm640, inf, %v603
    %v645 = vsel %vm641, inf, %v604
    %v646 = vsel %vm642, inf, %v605
    %v647 = vsel %vm643, inf, %v606
    %v648 = vmin.f32 %v644, %v645
    %649 = vmin.xlane.f32.xlu0 %v648
    %v650 = vpop.xlane.xlu0 %649
    %v651 = vmin.f32 %v646, %v647
    %652 = vmin.xlane.f32.xlu0 %v651
    %v653 = vpop.xlane.xlu0 %652
    %vm654 = vcmp.eq.f32.partialorder %v644, %v650
    %vm655 = vcmp.eq.f32.partialorder %v645, %v650
    %vm656 = vcmp.eq.f32.partialorder %v646, %v653
    %vm657 = vcmp.eq.f32.partialorder %v647, %v653
    %v658 = vsel %vm654, %v111, 3e+38
    %v659 = vsel %vm655, %v112, 3e+38
    %v660 = vsel %vm656, %v113, 3e+38
    %v661 = vsel %vm657, %v114, 3e+38
    %v662 = vmin.f32 %v658, %v659
    %663 = vmin.xlane.f32.xlu0 %v662
    %v664 = vpop.xlane.xlu0 %663
    %v665 = vmin.f32 %v660, %v661
    %666 = vmin.xlane.f32.xlu0 %v665
    %v667 = vpop.xlane.xlu0 %666
    %v668 = vcvt.f32.s32.to.zero.pseudo %v664
    %v669 = vcvt.f32.s32.to.zero.pseudo %v667
    %vm670 = vcmask 113768
    %671 = vst.msk [vmem:[#allocation2 + $0x8] sm:$0xff] %vm670, %v650
    %672 = vst.msk [vmem:[#allocation2 + $0x18] sm:$0xff] %vm670, %v653
    %673 = vst.msk [vmem:[#allocation3 + $0x8] sm:$0xff] %vm670, %v668
    %674 = vst.msk [vmem:[#allocation3 + $0x18] sm:$0xff] %vm670, %v669
    %675 = vst.msk [vmem:[#allocation4] sm:$0xff] %vm670, %v668
    %676 = vst.msk [vmem:[#allocation4 + $0x8] sm:$0xff] %vm670, %v669
    %vm677 = vcmp.eq.s32.totalorder %v107, %v668
    %vm678 = vcmp.eq.s32.totalorder %v108, %v668
    %vm679 = vcmp.eq.s32.totalorder %v109, %v669
    %vm680 = vcmp.eq.s32.totalorder %v110, %v669
    %vm681 = vmand %vm654, %vm677
    %vm682 = vmand %vm655, %vm678
    %vm683 = vmand %vm656, %vm679
    %vm684 = vmand %vm657, %vm680
    %v685 = vsel %vm681, inf, %v644
    %v686 = vsel %vm682, inf, %v645
    %v687 = vsel %vm683, inf, %v646
    %v688 = vsel %vm684, inf, %v647
    %v689 = vmin.f32 %v685, %v686
    %690 = vmin.xlane.f32.xlu0 %v689
    %v691 = vpop.xlane.xlu0 %690
    %v692 = vmin.f32 %v687, %v688
    %693 = vmin.xlane.f32.xlu0 %v692
    %v694 = vpop.xlane.xlu0 %693
    %vm695 = vcmp.eq.f32.partialorder %v685, %v691
    %vm696 = vcmp.eq.f32.partialorder %v686, %v691
    %vm697 = vcmp.eq.f32.partialorder %v687, %v694
    %vm698 = vcmp.eq.f32.partialorder %v688, %v694
    %v699 = vsel %vm695, %v111, 3e+38
    %v700 = vsel %vm696, %v112, 3e+38
    %v701 = vsel %vm697, %v113, 3e+38
    %v702 = vsel %vm698, %v114, 3e+38
    %v703 = vmin.f32 %v699, %v700
    %704 = vmin.xlane.f32.xlu0 %v703
    %v705 = vpop.xlane.xlu0 %704
    %v706 = vmin.f32 %v701, %v702
    %707 = vmin.xlane.f32.xlu0 %v706
    %v708 = vpop.xlane.xlu0 %707
    %v709 = vcvt.f32.s32.to.zero.pseudo %v705
    %v710 = vcvt.f32.s32.to.zero.pseudo %v708
    %vm711 = vcmask 121968
    %712 = vst.msk [vmem:[#allocation2 + $0x8] sm:$0xff] %vm711, %v691
    %713 = vst.msk [vmem:[#allocation2 + $0x18] sm:$0xff] %vm711, %v694
    %714 = vst.msk [vmem:[#allocation3 + $0x8] sm:$0xff] %vm711, %v709
    %715 = vst.msk [vmem:[#allocation3 + $0x18] sm:$0xff] %vm711, %v710
    %716 = vst.msk [vmem:[#allocation4] sm:$0xff] %vm711, %v709
    %717 = vst.msk [vmem:[#allocation4 + $0x8] sm:$0xff] %vm711, %v710
    %vm718 = vcmp.eq.s32.totalorder %v107, %v709
    %vm719 = vcmp.eq.s32.totalorder %v108, %v709
    %vm720 = vcmp.eq.s32.totalorder %v109, %v710
    %vm721 = vcmp.eq.s32.totalorder %v110, %v710
    %vm722 = vmand %vm695, %vm718
    %vm723 = vmand %vm696, %vm719
    %vm724 = vmand %vm697, %vm720
    %vm725 = vmand %vm698, %vm721
    %v726 = vsel %vm722, inf, %v685
    %v727 = vsel %vm723, inf, %v686
    %v728 = vsel %vm724, inf, %v687
    %v729 = vsel %vm725, inf, %v688
    %v730 = vmin.f32 %v726, %v727
    %731 = vmin.xlane.f32.xlu0 %v730
    %v732 = vpop.xlane.xlu0 %731
    %v733 = vmin.f32 %v728, %v729
    %734 = vmin.xlane.f32.xlu0 %v733
    %v735 = vpop.xlane.xlu0 %734
    %vm736 = vcmp.eq.f32.partialorder %v726, %v732
    %vm737 = vcmp.eq.f32.partialorder %v727, %v732
    %vm738 = vcmp.eq.f32.partialorder %v728, %v735
    %vm739 = vcmp.eq.f32.partialorder %v729, %v735
    %v740 = vsel %vm736, %v111, 3e+38
    %v741 = vsel %vm737, %v112, 3e+38
    %v742 = vsel %vm738, %v113, 3e+38
    %v743 = vsel %vm739, %v114, 3e+38
    %v744 = vmin.f32 %v740, %v741
    %745 = vmin.xlane.f32.xlu0 %v744
    %v746 = vpop.xlane.xlu0 %745
    %v747 = vmin.f32 %v742, %v743
    %748 = vmin.xlane.f32.xlu0 %v747
    %v749 = vpop.xlane.xlu0 %748
    %v750 = vcvt.f32.s32.to.zero.pseudo %v746
    %v751 = vcvt.f32.s32.to.zero.pseudo %v749
    %vm752 = vcmask 130168
    %753 = vst.msk [vmem:[#allocation2 + $0x8] sm:$0xff] %vm752, %v732
    %754 = vst.msk [vmem:[#allocation2 + $0x18] sm:$0xff] %vm752, %v735
    %755 = vst.msk [vmem:[#allocation3 + $0x8] sm:$0xff] %vm752, %v750
    %756 = vst.msk [vmem:[#allocation3 + $0x18] sm:$0xff] %vm752, %v751
    %757 = vst.msk [vmem:[#allocation4] sm:$0xff] %vm752, %v750
    %758 = vst.msk [vmem:[#allocation4 + $0x8] sm:$0xff] %vm752, %v751
    // Predicated region
    $region22: #{tpu_custom_call.1} parent=1 // pred_check
      _
    $region23: #{tpu_custom_call.1} parent=1 // pred_check_branch
      %760 = sbr.rel (0) target = $region25
    $region24: #{tpu_custom_call.1} parent=1 // pred_region
      %762 = vsyncadd [#allocation5], 0
      %s763 = sshll.u32 [#allocation4], 4
      %s764 = int_to_ptr.vmem [resolvable:$true] %s763
      %s765 = sshll.u32 %s4, 4
      %s766 = int_to_ptr.hbm [resolvable:$true] %s765
      %771 = dma.vmem_to_hbm [thread:$0]  %s764, 256, %s766, [#allocation5], 128, 128, 8
    $region25: #{tpu_custom_call.1} parent=1 // pred_fallthru
      _
    // Predicated region
    $region26: #{tpu_custom_call.1} parent=1 // pred_check
      _
    $region27: #{tpu_custom_call.1} parent=1 // pred_check_branch
      %773 = sbr.rel (0) target = $region29
    $region28: #{tpu_custom_call.1} parent=1 // pred_region
      %775 = dma.done [#allocation5], 256
    $region29: #{tpu_custom_call.1} parent=1 // pred_fallthru
      _
    %776 = vsyncpa [#allocation5], 1

</llo_original>
